<compile_context>
chip_gen: v5e
topology: v5e:2x2
jax: 0.10.0
libtpu: 0.0.40
codegen_flags: <defaults>
</compile_context>

<pallas_src>
import numpy as np
import jax
import jax.numpy as jnp
from jax import lax
from jax.experimental import pallas as pl
from jax.experimental.pallas import tpu as pltpu

VMEM_SPEC = pl.BlockSpec(memory_space=pltpu.MemorySpace.VMEM)
HEAD_PAD = 128          # lane-dense width for the head output


# ------------------------------ fused kernel --------------------------------

def make_fused_kernel(H, Hh, users_num, num_uavs, S, deg, src0, alpha,
                      dst_runs, woffs, boffs):
    twoU = 2 * users_num
    N = twoU + num_uavs
    E = S * deg
    H3 = 3 * Hh
    H4 = 4 * Hh

    def kernel(x_ref, wmat_ref, bvec_ref, out_ref, emb_sc, xj_sc):
        def W(name):
            r, rr, cc = woffs[name]
            return wmat_ref[r:r + rr, 0:cc]

        def B(name):
            r, cc = boffs[name]
            return bvec_ref[r:r + 1, 0:cc]

        def sigmoid(v):                       # 1 EUP push (tanh identity)
            return 0.5 * jnp.tanh(0.5 * v) + 0.5

        def cell(pre, h_prev, c_prev, whh):
            # pre = x_t @ Wih + bias; gate columns permuted to (i, f, o | g)
            if h_prev is None:
                g = pre
            else:
                g = pre + jnp.dot(h_prev, whh, preferred_element_type=jnp.float32)
            ifo = sigmoid(g[:, 0:H3])
            gg = jnp.tanh(g[:, H3:H4])
            if c_prev is None:
                c = ifo[:, 0:Hh] * gg
            else:
                c = ifo[:, Hh:2 * Hh] * c_prev + ifo[:, 0:Hh] * gg
            h = ifo[:, 2 * Hh:H3] * jnp.tanh(c)
            return h, c

        # ---------------- pre-propagate: users_lstm + uav_linear ----------------
        # K=2 input projections on the VPU (both directions in one 128-lane row).
        x_users = x_ref[0:twoU, :]
        pre_u = (x_users[:, 0:1] * B('uW0') + x_users[:, 1:2] * B('uW1') + B('ub'))
        pre_uf = pre_u[:, 0:H4]               # forward-direction gate pre-acts
        pre_ub = pre_u[:, H4:2 * H4]          # backward-direction gate pre-acts

        whh_f = W('whh_f')
        whh_b = W('whh_b')
        hf0, cf0 = cell(pre_uf[0:users_num, :], None, None, None)       # fwd t=0
        hf1, _ = cell(pre_uf[users_num:twoU, :], hf0, cf0, whh_f)       # fwd t=1
        hb1, cb1 = cell(pre_ub[users_num:twoU, :], None, None, None)    # bwd t=1
        hb0, _ = cell(pre_ub[0:users_num, :], hb1, cb1, whh_b)          # bwd t=0

        # uav_linear, K=2 -> VPU broadcast-FMA
        x_uav = x_ref[twoU:N, :]
        uav_emb = (x_uav[:, 0:1] * B('uavW0') + x_uav[:, 1:2] * B('uavW1')
                   + B('uav_b'))

        # x_emb assembly: 4 small half-lane + 1 full-width store (kept as masked
        # scratch writes -- cheapest safe assembly at H=32).
        emb_sc[0:users_num, 0:Hh] = hf0
        emb_sc[0:users_num, Hh:H] = hb0
        emb_sc[users_num:twoU, 0:Hh] = hf1
        emb_sc[users_num:twoU, Hh:H] = hb1
        emb_sc[twoU:N, :] = uav_emb
        x_emb = emb_sc[...]                                            # [N, H]

        # ---------------- edge path (batched over all E edges) -----------------
        # x_j gather: static contiguous destination runs (edge_index is static).
        # TODO(synk): at realistic E use scalar-prefetched dst indices + gridded
        # edge tiles instead of trace-time run copies.
        off = 0
        for d0, ln in dst_runs:
            xj_sc[off:off + ln, :] = x_emb[d0:d0 + ln, :]
            off += ln
        xj = xj_sc[...]                                                # [E, H]

        # per-source precomputation: [w1a | a_q] fused -> [S, H+1]
        # (column H = x_i attention logit incl. folded bias b_eff)
        x_src = x_emb[src0:src0 + S, :]
        src_pre = (jnp.dot(x_src, W('w1aq'), preferred_element_type=jnp.float32)
                   + B('b1beff'))                                      # [S, H+1]

        # tiny one-hot segment matrices built from iota (no HBM inputs)
        er = lax.broadcasted_iota(jnp.int32, (S, E), 1)
        sr = lax.broadcasted_iota(jnp.int32, (S, E), 0) * deg
        seg = ((er >= sr) & (er < sr + deg)).astype(jnp.float32)       # [S, E]
        et = lax.broadcasted_iota(jnp.int32, (E, S), 0)
        st = lax.broadcasted_iota(jnp.int32, (E, S), 1) * deg
        segT = ((et >= st) & (et < st + deg)).astype(jnp.float32)      # [E, S]
        nr = lax.broadcasted_iota(jnp.int32, (N, S), 0)
        nc = lax.broadcasted_iota(jnp.int32, (N, S), 1) + src0
        segN = (nr == nc).astype(jnp.float32)                          # [N, S]

        src_pre_e = jnp.dot(segT, src_pre,
                            preferred_element_type=jnp.float32)        # [E, H+1]

        # message MLP over all edges in two batched matmuls
        h1 = jnp.maximum(
            jnp.dot(xj, W('w1b'), preferred_element_type=jnp.float32)
            + src_pre_e[:, 0:H], 0.0)
        msg = jnp.maximum(
            jnp.dot(h1, W('w2'), preferred_element_type=jnp.float32)
            + B('b2'), 0.0)                                            # [E, H]

        # attention logits (Wq/Wr/att projections folded at trace time)
        logit = (jnp.dot(msg, W('ar'), preferred_element_type=jnp.float32)
                 + src_pre_e[:, H:H + 1])                              # [E, 1]
        logit = jnp.where(logit > 0, logit, alpha * logit)             # LeakyReLU

        # per-source softmax (grouped) with the mean-aggregation /deg folded in.
        # TODO(synk): global-max shift; swap in a segmented max if trained logits
        # can differ by >~80 across source groups.
        lmax = jnp.max(logit, axis=0, keepdims=True)
        ev = jnp.exp(logit - lmax)                                     # [E, 1]
        gsum = jnp.dot(seg, ev, preferred_element_type=jnp.float32)    # [S, 1]
        den_e = jnp.dot(segT, gsum, preferred_element_type=jnp.float32)  # [E, 1]
        w_e = ev / (den_e * float(deg))
        agg = jnp.dot(seg, w_e * msg, preferred_element_type=jnp.float32)  # [S,H]

        # ---------------- update MLP (aggr scattered via [N,S] one-hot) ---------
        base = (jnp.dot(x_emb, W('u1b'), preferred_element_type=jnp.float32)
                + B('c1'))                                             # [N, H]
        contrib = jnp.dot(
            segN, jnp.dot(agg, W('u1a'), preferred_element_type=jnp.float32),
            preferred_element_type=jnp.float32)                        # [N, H]
        hu = jnp.maximum(base + contrib, 0.0)
        x_upd = jnp.maximum(
            jnp.dot(hu, W('u2'), preferred_element_type=jnp.float32)
            + B('c2'), 0.0)                                            # [N, H]

        # ---------------- uav_lstm (batch=1, unrolled, input proj hoisted) ------
        uav_in = x_upd[twoU:N, :]
        pre_v = (jnp.dot(uav_in, W('vih'), preferred_element_type=jnp.float32)
                 + B('vb'))                                            # [nu, 8Hh]
        pre_vf = pre_v[:, 0:H4]
        pre_vb = pre_v[:, H4:2 * H4]
        vhh_f = W('vhh_f')
        vhh_b = W('vhh_b')

        tcol = lax.broadcasted_iota(jnp.int32, (num_uavs, 1), 0)

        def onehot(t):
            return (tcol == t).astype(jnp.float32)

        h, c = cell(pre_vf[0:1, :], None, None, None)                  # forward
        hf_stack = onehot(0) * h
        for t in range(1, num_uavs):
            h, c = cell(pre_vf[t:t + 1, :], h, c, vhh_f)
            hf_stack = hf_stack + onehot(t) * h
        h, c = cell(pre_vb[num_uavs - 1:num_uavs, :], None, None, None)  # backward
        hb_stack = onehot(num_uavs - 1) * h
        for t in range(num_uavs - 2, -1, -1):
            h, c = cell(pre_vb[t:t + 1, :], h, c, vhh_b)
            hb_stack = hb_stack + onehot(t) * h

        # ---------------- head: linear2 + sigmoid (lane-dense 128-wide stores) --
        hw = W('hw')
        hb_row = B('hb')
        out_ref[0:twoU, :] = sigmoid(
            jnp.dot(x_upd[0:twoU, :], hw, preferred_element_type=jnp.float32)
            + hb_row)
        out_ref[twoU:N, :] = sigmoid(
            jnp.dot(hf_stack, hw[0:Hh, :], preferred_element_type=jnp.float32)
            + jnp.dot(hb_stack, hw[Hh:H, :], preferred_element_type=jnp.float32)
            + hb_row)

    return kernel


# ------------------------------ weight packing -------------------------------

def _pack_wmat(blocks):
    """Row-pack named [r, c] matrices into one [R, lane_w] slab (one DMA)."""
    lane_w = ((max(int(a.shape[1]) for _, a in blocks) + 127) // 128) * 128
    parts, offs, r = [], {}, 0
    for name, a in blocks:
        a = jnp.asarray(a, jnp.float32)
        rr, cc = int(a.shape[0]), int(a.shape[1])
        rpad = (-rr) % 8
        offs[name] = (r, rr, cc)
        parts.append(jnp.pad(a, ((0, rpad), (0, lane_w - cc))))
        r += rr + rpad
    return jnp.concatenate(parts, axis=0), offs


def _pack_bvec(rows):
    """Pack named [1, c] row vectors into one [R, lane_w] slab (one DMA)."""
    lane_w = ((max(int(np.prod(a.shape)) for _, a in rows) + 127) // 128) * 128
    parts, offs = [], {}
    for i, (name, a) in enumerate(rows):
        a = jnp.asarray(a, jnp.float32).reshape(1, -1)
        cc = int(a.shape[1])
        offs[name] = (i, cc)
        parts.append(jnp.pad(a, ((0, 0), (0, lane_w - cc))))
    mat = jnp.concatenate(parts, axis=0)
    rpad = (-mat.shape[0]) % 8
    if rpad:
        mat = jnp.pad(mat, ((0, rpad), (0, 0)))
    return mat, offs


# ------------------------------- parameters ---------------------------------

def init_params(key, H):
    Hh = H // 2
    ks = iter(jax.random.split(key, 40))

    def U(shape, fan_in):
        lim = 1.0 / np.sqrt(fan_in)
        return jax.random.uniform(next(ks), shape, jnp.float32, -lim, lim)

    p = {}
    p['users_lstm'] = dict(
        Wih_f=U((2, 4 * Hh), Hh), Whh_f=U((Hh, 4 * Hh), Hh), b_f=U((1, 4 * Hh), Hh),
        Wih_b=U((2, 4 * Hh), Hh), Whh_b=U((Hh, 4 * Hh), Hh), b_b=U((1, 4 * Hh), Hh))
    p['uav_W'] = U((2, H), 2)
    p['uav_b'] = U((1, H), 2)
    p['msg_W1'] = U((2 * H, H), 2 * H); p['msg_b1'] = U((1, H), 2 * H)
    p['msg_W2'] = U((H, H), H);         p['msg_b2'] = U((1, H), H)
    p['Wq'] = U((H, H), H); p['bq'] = U((1, H), H)
    p['Wr'] = U((H, H), H); p['br'] = U((1, H), H)
    p['att_wq'] = U((1, H), 2 * H)      # first half of att Linear(2H, 1) weight
    p['att_wr'] = U((1, H), 2 * H)      # second half
    p['att_b'] = U((1, 1), 2 * H)
    p['upd_W1'] = U((2 * H, H), 2 * H); p['upd_b1'] = U((1, H), 2 * H)
    p['upd_W2'] = U((H, H), H);         p['upd_b2'] = U((1, H), H)
    p['uav_lstm'] = dict(
        Wih_f=U((H, 4 * Hh), Hh), Whh_f=U((Hh, 4 * Hh), Hh), b_f=U((1, 4 * Hh), Hh),
        Wih_b=U((H, 4 * Hh), Hh), Whh_b=U((Hh, 4 * Hh), Hh), b_b=U((1, 4 * Hh), Hh))
    p['lin2_W'] = U((H, 2), H)
    p['lin2_b'] = U((1, 2), H)
    return p


# ------------------------------ forward pass ---------------------------------

def uav_forward(params, x, edge_index, alpha):
    """x: [N, 2] node features. edge_index: np.ndarray [2, E] (static)."""
    H = params['Wq'].shape[0]
    Hh = H // 2
    N = x.shape[0]

    src = np.asarray(edge_index[0])
    dst = np.asarray(edge_index[1])
    src0 = int(src[0]); src_last = int(src[-1])
    S = src_last - src0 + 1                 # len(source_index)
    E = int(src.shape[0])
    deg = E // S
    users_num = src0 // 2
    num_uavs = N - 2 * users_num
    assert np.array_equal(src, np.repeat(np.arange(src0, src_last + 1), deg)), \
        "edges must be grouped contiguously per source with equal degree"
    # TODO(synk): non-uniform degree / non-contiguous sources need PyG's general
    # scatter path; the fused kernel assumes the layout asserted above.

    # destination gather as maximal contiguous runs (trace-time static indices)
    dst_runs = []
    run_start, run_len = int(dst[0]), 1
    for e in range(1, E):
        if int(dst[e]) == int(dst[e - 1]) + 1:
            run_len += 1
        else:
            dst_runs.append((run_start, run_len))
            run_start, run_len = int(dst[e]), 1
    dst_runs.append((run_start, run_len))

    # fold attention projections (exact algebra, done once at trace time)
    a_q = params['Wq'] @ params['att_wq'].T                              # [H,1]
    a_r = params['Wr'] @ params['att_wr'].T                              # [H,1]
    b_eff = (params['bq'] @ params['att_wq'].T
             + params['br'] @ params['att_wr'].T + params['att_b'])      # [1,1]

    w1a, w1b = params['msg_W1'][:H], params['msg_W1'][H:]
    u1a, u1b = params['upd_W1'][:H], params['upd_W1'][H:]

    # LSTM gate-column permutation: PyTorch (i,f,g,o) -> kernel (i,f,o | g)
    perm = np.concatenate([np.arange(Hh), np.arange(Hh) + Hh,
                           np.arange(Hh) + 3 * Hh, np.arange(Hh) + 2 * Hh])
    pu, pv = params['users_lstm'], params['uav_lstm']

    uW0 = jnp.concatenate([pu['Wih_f'][0:1, perm], pu['Wih_b'][0:1, perm]], axis=1)
    uW1 = jnp.concatenate([pu['Wih_f'][1:2, perm], pu['Wih_b'][1:2, perm]], axis=1)
    ub = jnp.concatenate([pu['b_f'][:, perm], pu['b_b'][:, perm]], axis=1)
    vih = jnp.concatenate([pv['Wih_f'][:, perm], pv['Wih_b'][:, perm]], axis=1)
    vb = jnp.concatenate([pv['b_f'][:, perm], pv['b_b'][:, perm]], axis=1)

    # lane-dense head: pad linear2 to 128 output lanes, slice after the kernel
    hw = jnp.pad(params['lin2_W'], ((0, 0), (0, HEAD_PAD - 2)))
    hb = jnp.pad(params['lin2_b'], ((0, 0), (0, HEAD_PAD - 2)))

    wmat, woffs = _pack_wmat([
        ('w1aq', jnp.concatenate([w1a, a_q], axis=1)),   # [H, H+1]
        ('w1b', w1b),
        ('w2', params['msg_W2']),
        ('ar', a_r),
        ('u1a', u1a),
        ('u1b', u1b),
        ('u2', params['upd_W2']),
        ('whh_f', pu['Whh_f'][:, perm]),
        ('whh_b', pu['Whh_b'][:, perm]),
        ('vih', vih),                                    # [H, 8Hh] fwd|bwd
        ('vhh_f', pv['Whh_f'][:, perm]),
        ('vhh_b', pv['Whh_b'][:, perm]),
        ('hw', hw),
    ])
    bvec, boffs = _pack_bvec([
        ('b1beff', jnp.concatenate([params['msg_b1'], b_eff], axis=1)),  # [1,H+1]
        ('b2', params['msg_b2']),
        ('c1', params['upd_b1']),
        ('c2', params['upd_b2']),
        ('hb', hb),
        ('uav_b', params['uav_b']),
        ('uavW0', params['uav_W'][0:1, :]),
        ('uavW1', params['uav_W'][1:2, :]),
        ('uW0', uW0),
        ('uW1', uW1),
        ('ub', ub),
        ('vb', vb),
    ])

    kernel = make_fused_kernel(H, Hh, users_num, num_uavs, S, deg, src0, alpha,
                               tuple(dst_runs), woffs, boffs)

    out_pad = pl.pallas_call(
        kernel,
        out_shape=jax.ShapeDtypeStruct((N, HEAD_PAD), jnp.float32),
        in_specs=[VMEM_SPEC] * 3,
        out_specs=VMEM_SPEC,
        scratch_shapes=[
            pltpu.VMEM((N, H), jnp.float32),   # emb_sc : x_emb assembly
            pltpu.VMEM((E, H), jnp.float32),   # xj_sc  : gathered x_j rows
        ],
        # TODO(synk): at realistic E/S grid over edge tiles with
        # dimension_semantics=("parallel",...), bf16 MXU operands, and an
        # explicit vmem_limit (v7x: 64 MiB VMEM, 2 TCs); ungridded at toy size.
    )(x, wmat, bvec)

    return out_pad[:, :2]


# --------------------------- pure-numpy reference ----------------------------

def uav_reference(params, x, edge_index, alpha):
    """Straightforward float64 reference mirroring the PyTorch module."""
    def a64(v):
        return np.asarray(v, np.float64)

    H = params['Wq'].shape[0]
    Hh = H // 2
    x = a64(x)
    src = np.asarray(edge_index[0]); dst = np.asarray(edge_index[1])
    src0 = int(src[0])
    users_num = src0 // 2
    twoU = 2 * users_num
    N = x.shape[0]
    S = int(src[-1]) - src0 + 1
    E = src.shape[0]
    deg = E // S

    def sigm(v):
        return 1.0 / (1.0 + np.exp(-v))

    def lstm_cell(x_t, h, c, Wih, Whh, b):
        g = x_t @ Wih + h @ Whh + b
        i = sigm(g[:, 0:Hh]); f = sigm(g[:, Hh:2 * Hh])
        gg = np.tanh(g[:, 2 * Hh:3 * Hh]); o = sigm(g[:, 3 * Hh:4 * Hh])
        c2 = f * c + i * gg
        return o * np.tanh(c2), c2

    pu = params['users_lstm']
    Wif, Whf, bf = a64(pu['Wih_f']), a64(pu['Whh_f']), a64(pu['b_f'])
    Wib, Whb, bb = a64(pu['Wih_b']), a64(pu['Whh_b']), a64(pu['b_b'])
    x0, x1 = x[0:users_num], x[users_num:twoU]
    z = np.zeros((users_num, Hh))
    hf0, cf0 = lstm_cell(x0, z, z, Wif, Whf, bf)
    hf1, _ = lstm_cell(x1, hf0, cf0, Wif, Whf, bf)
    hb1, cb1 = lstm_cell(x1, z, z, Wib, Whb, bb)
    hb0, _ = lstm_cell(x0, hb1, cb1, Wib, Whb, bb)
    users = np.concatenate([np.concatenate([hf0, hb0], 1),
                            np.concatenate([hf1, hb1], 1)], 0)
    uavs = x[twoU:] @ a64(params['uav_W']) + a64(params['uav_b'])
    xe = np.concatenate([users, uavs], 0)

    x_i, x_j = xe[src], xe[dst]
    h1 = np.maximum(np.concatenate([x_i, x_j], 1) @ a64(params['msg_W1'])
                    + a64(params['msg_b1']), 0.0)
    msg = np.maximum(h1 @ a64(params['msg_W2']) + a64(params['msg_b2']), 0.0)
    q = x_i @ a64(params['Wq']) + a64(params['bq'])
    r = msg @ a64(params['Wr']) + a64(params['br'])
    att_w = np.concatenate([a64(params['att_wq']), a64(params['att_wr'])], 1)
    logit = np.concatenate([q, r], 1) @ att_w.T + a64(params['att_b'])
    logit = np.where(logit > 0, logit, alpha * logit)
    lw = logit.reshape(S, deg)
    lw = lw - lw.max(axis=1, keepdims=True)
    w = (np.exp(lw) / np.exp(lw).sum(axis=1, keepdims=True)).reshape(E, 1)
    aggr = np.zeros((N, H))
    for s in range(S):
        aggr[src0 + s] = (w[s * deg:(s + 1) * deg]
                          * msg[s * deg:(s + 1) * deg]).sum(0) / deg
    hu = np.maximum(np.concatenate([aggr, xe], 1) @ a64(params['upd_W1'])
                    + a64(params['upd_b1']), 0.0)
    xu = np.maximum(hu @ a64(params['upd_W2']) + a64(params['upd_b2']), 0.0)

    pv = params['uav_lstm']
    Vif, Vhf, vbf = a64(pv['Wih_f']), a64(pv['Whh_f']), a64(pv['b_f'])
    Vib, Vhb, vbb = a64(pv['Wih_b']), a64(pv['Whh_b']), a64(pv['b_b'])
    nu = N - twoU
    hfw = np.zeros((nu, Hh)); hbw = np.zeros((nu, Hh))
    h = np.zeros((1, Hh)); c = np.zeros((1, Hh))
    for t in range(nu):
        h, c = lstm_cell(xu[twoU + t:twoU + t + 1], h, c, Vif, Vhf, vbf)
        hfw[t] = h[0]
    h = np.zeros((1, Hh)); c = np.zeros((1, Hh))
    for t in range(nu - 1, -1, -1):
        h, c = lstm_cell(xu[twoU + t:twoU + t + 1], h, c, Vib, Vhb, vbb)
        hbw[t] = h[0]
    xf = np.concatenate([xu[0:twoU], np.concatenate([hfw, hbw], 1)], 0)
    return sigm(xf @ a64(params['lin2_W']) + a64(params['lin2_b']))


# ----------------------------------- main ------------------------------------

if __name__ == "__main__":
    H = 32
    alpha = 0.2
    users_num = 4
    num_uavs = 2
    N = 2 * users_num + num_uavs            # 8 user-endpoints + 2 UAVs = 10 nodes

    key = jax.random.PRNGKey(0)
    kx, kp = jax.random.split(key)
    x = jax.random.uniform(kx, (N, 2), jnp.float32)

    # Each UAV (source) connects to every user endpoint; edges grouped per source.
    src0 = 2 * users_num
    edge_src = np.repeat(np.arange(src0, src0 + num_uavs), 2 * users_num)
    edge_dst = np.tile(np.arange(2 * users_num), num_uavs)
    edge_index = np.stack([edge_src, edge_dst]).astype(np.int32)   # [2, 16]

    params = init_params(kp, H)

    # jit so the trace-time folding / packing / final slice fuse around the
    # single Pallas custom call.
    fwd = jax.jit(lambda p, feats: uav_forward(p, feats, edge_index, alpha))
    out = jax.block_until_ready(fwd(params, x))

    assert out.shape == (N, 2), out.shape
    assert bool(jnp.all(jnp.isfinite(out)))
    assert bool(jnp.all((out >= 0.0) & (out <= 1.0)))   # sigmoid output

    ref = uav_reference(params, np.asarray(x), edge_index, alpha)
    np.testing.assert_allclose(np.asarray(out, np.float64), ref,
                               rtol=2e-2, atol=2e-2)
    print("KERNEL_OK")
</pallas_src>

<mosaic_0001>
module attributes {stable_mosaic.version = 11 : i64} {
  func.func @kernel(%arg0: memref<10x2xf32, #tpu.memory_space<vmem>>, %arg1: memref<352x128xf32, #tpu.memory_space<vmem>>, %arg2: memref<16x128xf32, #tpu.memory_space<vmem>>, %arg3: memref<10x128xf32, #tpu.memory_space<vmem>>, %arg4: memref<10x32xf32, #tpu.memory_space<vmem>>, %arg5: memref<16x32xf32, #tpu.memory_space<vmem>>) attributes {dimension_semantics = [], scalar_prefetch = 0 : i64, scratch_operands = 2 : i64, tpu.core_type = #tpu.core_type<tc>} {
    %c0 = arith.constant 0 : index
    %c0_0 = arith.constant 0 : index
    %0 = vector.load %arg0[%c0, %c0_0] : memref<10x2xf32, #tpu.memory_space<vmem>>, vector<8x2xf32>
    %1 = vector.extract_strided_slice %0 {offsets = [0, 0], sizes = [8, 1], strides = [1, 1]} : vector<8x2xf32> to vector<8x1xf32>
    %c8 = arith.constant 8 : index
    %c0_1 = arith.constant 0 : index
    %2 = vector.load %arg2[%c8, %c0_1] : memref<16x128xf32, #tpu.memory_space<vmem>>, vector<1x128xf32>
    %3 = vector.broadcast %1 : vector<8x1xf32> to vector<8x128xf32>
    %4 = vector.broadcast %2 : vector<1x128xf32> to vector<8x128xf32>
    %5 = arith.mulf %3, %4 : vector<8x128xf32>
    %6 = vector.extract_strided_slice %0 {offsets = [0, 1], sizes = [8, 1], strides = [1, 1]} : vector<8x2xf32> to vector<8x1xf32>
    %c9 = arith.constant 9 : index
    %c0_2 = arith.constant 0 : index
    %7 = vector.load %arg2[%c9, %c0_2] : memref<16x128xf32, #tpu.memory_space<vmem>>, vector<1x128xf32>
    %8 = vector.broadcast %6 : vector<8x1xf32> to vector<8x128xf32>
    %9 = vector.broadcast %7 : vector<1x128xf32> to vector<8x128xf32>
    %10 = arith.mulf %8, %9 : vector<8x128xf32>
    %11 = arith.addf %5, %10 : vector<8x128xf32>
    %c10 = arith.constant 10 : index
    %c0_3 = arith.constant 0 : index
    %12 = vector.load %arg2[%c10, %c0_3] : memref<16x128xf32, #tpu.memory_space<vmem>>, vector<1x128xf32>
    %13 = vector.broadcast %12 : vector<1x128xf32> to vector<8x128xf32>
    %14 = arith.addf %11, %13 : vector<8x128xf32>
    %15 = vector.extract_strided_slice %14 {offsets = [0, 0], sizes = [8, 64], strides = [1, 1]} : vector<8x128xf32> to vector<8x64xf32>
    %16 = vector.extract_strided_slice %14 {offsets = [0, 64], sizes = [8, 64], strides = [1, 1]} : vector<8x128xf32> to vector<8x64xf32>
    %c224 = arith.constant 224 : index
    %c0_4 = arith.constant 0 : index
    %17 = vector.load %arg1[%c224, %c0_4] : memref<352x128xf32, #tpu.memory_space<vmem>>, vector<16x64xf32>
    %c240 = arith.constant 240 : index
    %c0_5 = arith.constant 0 : index
    %18 = vector.load %arg1[%c240, %c0_5] : memref<352x128xf32, #tpu.memory_space<vmem>>, vector<16x64xf32>
    %19 = vector.extract_strided_slice %15 {offsets = [0, 0], sizes = [4, 64], strides = [1, 1]} : vector<8x64xf32> to vector<4x64xf32>
    %20 = vector.extract_strided_slice %19 {offsets = [0, 0], sizes = [4, 48], strides = [1, 1]} : vector<4x64xf32> to vector<4x48xf32>
    %cst = arith.constant 5.000000e-01 : f32
    %21 = vector.broadcast %cst : f32 to vector<4x48xf32>
    %22 = arith.mulf %21, %20 : vector<4x48xf32>
    %23 = math.tanh %22 : vector<4x48xf32>
    %cst_6 = arith.constant 5.000000e-01 : f32
    %24 = vector.broadcast %cst_6 : f32 to vector<4x48xf32>
    %25 = arith.mulf %24, %23 : vector<4x48xf32>
    %cst_7 = arith.constant 5.000000e-01 : f32
    %26 = vector.broadcast %cst_7 : f32 to vector<4x48xf32>
    %27 = arith.addf %25, %26 : vector<4x48xf32>
    %28 = vector.extract_strided_slice %19 {offsets = [0, 48], sizes = [4, 16], strides = [1, 1]} : vector<4x64xf32> to vector<4x16xf32>
    %29 = math.tanh %28 : vector<4x16xf32>
    %30 = vector.extract_strided_slice %27 {offsets = [0, 0], sizes = [4, 16], strides = [1, 1]} : vector<4x48xf32> to vector<4x16xf32>
    %31 = arith.mulf %30, %29 : vector<4x16xf32>
    %32 = vector.extract_strided_slice %27 {offsets = [0, 32], sizes = [4, 16], strides = [1, 1]} : vector<4x48xf32> to vector<4x16xf32>
    %33 = math.tanh %31 : vector<4x16xf32>
    %34 = arith.mulf %32, %33 : vector<4x16xf32>
    %35 = vector.extract_strided_slice %15 {offsets = [4, 0], sizes = [4, 64], strides = [1, 1]} : vector<8x64xf32> to vector<4x64xf32>
    %cst_8 = arith.constant dense<0.000000e+00> : vector<4x64xf32>
    %36 = tpu.matmul %34, %17, %cst_8 {dimension_numbers = #tpu.dot_dimension_numbers<[1], [0], [0], [1], [0, 0, 1, 1], [], []>} : vector<4x16xf32>, vector<16x64xf32>, vector<4x64xf32> -> vector<4x64xf32>
    %37 = arith.addf %35, %36 : vector<4x64xf32>
    %38 = vector.extract_strided_slice %37 {offsets = [0, 0], sizes = [4, 48], strides = [1, 1]} : vector<4x64xf32> to vector<4x48xf32>
    %cst_9 = arith.constant 5.000000e-01 : f32
    %39 = vector.broadcast %cst_9 : f32 to vector<4x48xf32>
    %40 = arith.mulf %39, %38 : vector<4x48xf32>
    %41 = math.tanh %40 : vector<4x48xf32>
    %cst_10 = arith.constant 5.000000e-01 : f32
    %42 = vector.broadcast %cst_10 : f32 to vector<4x48xf32>
    %43 = arith.mulf %42, %41 : vector<4x48xf32>
    %cst_11 = arith.constant 5.000000e-01 : f32
    %44 = vector.broadcast %cst_11 : f32 to vector<4x48xf32>
    %45 = arith.addf %43, %44 : vector<4x48xf32>
    %46 = vector.extract_strided_slice %37 {offsets = [0, 48], sizes = [4, 16], strides = [1, 1]} : vector<4x64xf32> to vector<4x16xf32>
    %47 = math.tanh %46 : vector<4x16xf32>
    %48 = vector.extract_strided_slice %45 {offsets = [0, 16], sizes = [4, 16], strides = [1, 1]} : vector<4x48xf32> to vector<4x16xf32>
    %49 = arith.mulf %48, %31 : vector<4x16xf32>
    %50 = vector.extract_strided_slice %45 {offsets = [0, 0], sizes = [4, 16], strides = [1, 1]} : vector<4x48xf32> to vector<4x16xf32>
    %51 = arith.mulf %50, %47 : vector<4x16xf32>
    %52 = arith.addf %49, %51 : vector<4x16xf32>
    %53 = vector.extract_strided_slice %45 {offsets = [0, 32], sizes = [4, 16], strides = [1, 1]} : vector<4x48xf32> to vector<4x16xf32>
    %54 = math.tanh %52 : vector<4x16xf32>
    %55 = arith.mulf %53, %54 : vector<4x16xf32>
    %56 = vector.extract_strided_slice %16 {offsets = [4, 0], sizes = [4, 64], strides = [1, 1]} : vector<8x64xf32> to vector<4x64xf32>
    %57 = vector.extract_strided_slice %56 {offsets = [0, 0], sizes = [4, 48], strides = [1, 1]} : vector<4x64xf32> to vector<4x48xf32>
    %cst_12 = arith.constant 5.000000e-01 : f32
    %58 = vector.broadcast %cst_12 : f32 to vector<4x48xf32>
    %59 = arith.mulf %58, %57 : vector<4x48xf32>
    %60 = math.tanh %59 : vector<4x48xf32>
    %cst_13 = arith.constant 5.000000e-01 : f32
    %61 = vector.broadcast %cst_13 : f32 to vector<4x48xf32>
    %62 = arith.mulf %61, %60 : vector<4x48xf32>
    %cst_14 = arith.constant 5.000000e-01 : f32
    %63 = vector.broadcast %cst_14 : f32 to vector<4x48xf32>
    %64 = arith.addf %62, %63 : vector<4x48xf32>
    %65 = vector.extract_strided_slice %56 {offsets = [0, 48], sizes = [4, 16], strides = [1, 1]} : vector<4x64xf32> to vector<4x16xf32>
    %66 = math.tanh %65 : vector<4x16xf32>
    %67 = vector.extract_strided_slice %64 {offsets = [0, 0], sizes = [4, 16], strides = [1, 1]} : vector<4x48xf32> to vector<4x16xf32>
    %68 = arith.mulf %67, %66 : vector<4x16xf32>
    %69 = vector.extract_strided_slice %64 {offsets = [0, 32], sizes = [4, 16], strides = [1, 1]} : vector<4x48xf32> to vector<4x16xf32>
    %70 = math.tanh %68 : vector<4x16xf32>
    %71 = arith.mulf %69, %70 : vector<4x16xf32>
    %72 = vector.extract_strided_slice %16 {offsets = [0, 0], sizes = [4, 64], strides = [1, 1]} : vector<8x64xf32> to vector<4x64xf32>
    %cst_15 = arith.constant dense<0.000000e+00> : vector<4x64xf32>
    %73 = tpu.matmul %71, %18, %cst_15 {dimension_numbers = #tpu.dot_dimension_numbers<[1], [0], [0], [1], [0, 0, 1, 1], [], []>} : vector<4x16xf32>, vector<16x64xf32>, vector<4x64xf32> -> vector<4x64xf32>
    %74 = arith.addf %72, %73 : vector<4x64xf32>
    %75 = vector.extract_strided_slice %74 {offsets = [0, 0], sizes = [4, 48], strides = [1, 1]} : vector<4x64xf32> to vector<4x48xf32>
    %cst_16 = arith.constant 5.000000e-01 : f32
    %76 = vector.broadcast %cst_16 : f32 to vector<4x48xf32>
    %77 = arith.mulf %76, %75 : vector<4x48xf32>
    %78 = math.tanh %77 : vector<4x48xf32>
    %cst_17 = arith.constant 5.000000e-01 : f32
    %79 = vector.broadcast %cst_17 : f32 to vector<4x48xf32>
    %80 = arith.mulf %79, %78 : vector<4x48xf32>
    %cst_18 = arith.constant 5.000000e-01 : f32
    %81 = vector.broadcast %cst_18 : f32 to vector<4x48xf32>
    %82 = arith.addf %80, %81 : vector<4x48xf32>
    %83 = vector.extract_strided_slice %74 {offsets = [0, 48], sizes = [4, 16], strides = [1, 1]} : vector<4x64xf32> to vector<4x16xf32>
    %84 = math.tanh %83 : vector<4x16xf32>
    %85 = vector.extract_strided_slice %82 {offsets = [0, 16], sizes = [4, 16], strides = [1, 1]} : vector<4x48xf32> to vector<4x16xf32>
    %86 = arith.mulf %85, %68 : vector<4x16xf32>
    %87 = vector.extract_strided_slice %82 {offsets = [0, 0], sizes = [4, 16], strides = [1, 1]} : vector<4x48xf32> to vector<4x16xf32>
    %88 = arith.mulf %87, %84 : vector<4x16xf32>
    %89 = arith.addf %86, %88 : vector<4x16xf32>
    %90 = vector.extract_strided_slice %82 {offsets = [0, 32], sizes = [4, 16], strides = [1, 1]} : vector<4x48xf32> to vector<4x16xf32>
    %91 = math.tanh %89 : vector<4x16xf32>
    %92 = arith.mulf %90, %91 : vector<4x16xf32>
    %c8_19 = arith.constant 8 : index
    %c0_20 = arith.constant 0 : index
    %93 = vector.load %arg0[%c8_19, %c0_20] : memref<10x2xf32, #tpu.memory_space<vmem>>, vector<2x2xf32>
    %94 = vector.extract_strided_slice %93 {offsets = [0, 0], sizes = [2, 1], strides = [1, 1]} : vector<2x2xf32> to vector<2x1xf32>
    %c6 = arith.constant 6 : index
    %c0_21 = arith.constant 0 : index
    %95 = vector.load %arg2[%c6, %c0_21] : memref<16x128xf32, #tpu.memory_space<vmem>>, vector<1x32xf32>
    %96 = vector.broadcast %94 : vector<2x1xf32> to vector<2x32xf32>
    %97 = vector.broadcast %95 : vector<1x32xf32> to vector<2x32xf32>
    %98 = arith.mulf %96, %97 : vector<2x32xf32>
    %99 = vector.extract_strided_slice %93 {offsets = [0, 1], sizes = [2, 1], strides = [1, 1]} : vector<2x2xf32> to vector<2x1xf32>
    %c7 = arith.constant 7 : index
    %c0_22 = arith.constant 0 : index
    %100 = vector.load %arg2[%c7, %c0_22] : memref<16x128xf32, #tpu.memory_space<vmem>>, vector<1x32xf32>
    %101 = vector.broadcast %99 : vector<2x1xf32> to vector<2x32xf32>
    %102 = vector.broadcast %100 : vector<1x32xf32> to vector<2x32xf32>
    %103 = arith.mulf %101, %102 : vector<2x32xf32>
    %104 = arith.addf %98, %103 : vector<2x32xf32>
    %c5 = arith.constant 5 : index
    %c0_23 = arith.constant 0 : index
    %105 = vector.load %arg2[%c5, %c0_23] : memref<16x128xf32, #tpu.memory_space<vmem>>, vector<1x32xf32>
    %106 = vector.broadcast %105 : vector<1x32xf32> to vector<2x32xf32>
    %107 = arith.addf %104, %106 : vector<2x32xf32>
    %c0_24 = arith.constant 0 : index
    %c0_25 = arith.constant 0 : index
    %108 = vector.load %arg4[%c0_24, %c0_25] : memref<10x32xf32, #tpu.memory_space<vmem>>, vector<4x16xf32>
    tpu.vector_store %arg4[%c0_24, %c0_25], %34 {strides = array<i32>} : memref<10x32xf32, #tpu.memory_space<vmem>>, vector<4x16xf32>,
    %c0_26 = arith.constant 0 : index
    %c16 = arith.constant 16 : index
    %109 = vector.load %arg4[%c0_26, %c16] : memref<10x32xf32, #tpu.memory_space<vmem>>, vector<4x16xf32>
    tpu.vector_store %arg4[%c0_26, %c16], %92 {strides = array<i32>} : memref<10x32xf32, #tpu.memory_space<vmem>>, vector<4x16xf32>,
    %c4 = arith.constant 4 : index
    %c0_27 = arith.constant 0 : index
    %110 = vector.load %arg4[%c4, %c0_27] : memref<10x32xf32, #tpu.memory_space<vmem>>, vector<4x16xf32>
    tpu.vector_store %arg4[%c4, %c0_27], %55 {strides = array<i32>} : memref<10x32xf32, #tpu.memory_space<vmem>>, vector<4x16xf32>,
    %c4_28 = arith.constant 4 : index
    %c16_29 = arith.constant 16 : index
    %111 = vector.load %arg4[%c4_28, %c16_29] : memref<10x32xf32, #tpu.memory_space<vmem>>, vector<4x16xf32>
    tpu.vector_store %arg4[%c4_28, %c16_29], %71 {strides = array<i32>} : memref<10x32xf32, #tpu.memory_space<vmem>>, vector<4x16xf32>,
    %c8_30 = arith.constant 8 : index
    %c0_31 = arith.constant 0 : index
    %112 = vector.load %arg4[%c8_30, %c0_31] : memref<10x32xf32, #tpu.memory_space<vmem>>, vector<2x32xf32>
    tpu.vector_store %arg4[%c8_30, %c0_31], %107 {strides = array<i32>} : memref<10x32xf32, #tpu.memory_space<vmem>>, vector<2x32xf32>,
    %c0_32 = arith.constant 0 : index
    %c0_33 = arith.constant 0 : index
    %113 = vector.load %arg4[%c0_32, %c0_33] : memref<10x32xf32, #tpu.memory_space<vmem>>, vector<10x32xf32>
    %114 = vector.extract_strided_slice %113 {offsets = [0, 0], sizes = [8, 32], strides = [1, 1]} : vector<10x32xf32> to vector<8x32xf32>
    %c0_34 = arith.constant 0 : index
    %c0_35 = arith.constant 0 : index
    %115 = vector.load %arg5[%c0_34, %c0_35] : memref<16x32xf32, #tpu.memory_space<vmem>>, vector<8x32xf32>
    tpu.vector_store %arg5[%c0_34, %c0_35], %114 {strides = array<i32>} : memref<16x32xf32, #tpu.memory_space<vmem>>, vector<8x32xf32>,
    %116 = vector.extract_strided_slice %113 {offsets = [0, 0], sizes = [8, 32], strides = [1, 1]} : vector<10x32xf32> to vector<8x32xf32>
    %c8_36 = arith.constant 8 : index
    %c0_37 = arith.constant 0 : index
    %117 = vector.load %arg5[%c8_36, %c0_37] : memref<16x32xf32, #tpu.memory_space<vmem>>, vector<8x32xf32>
    tpu.vector_store %arg5[%c8_36, %c0_37], %116 {strides = array<i32>} : memref<16x32xf32, #tpu.memory_space<vmem>>, vector<8x32xf32>,
    %c0_38 = arith.constant 0 : index
    %c0_39 = arith.constant 0 : index
    %118 = vector.load %arg5[%c0_38, %c0_39] : memref<16x32xf32, #tpu.memory_space<vmem>>, vector<16x32xf32>
    %119 = vector.extract_strided_slice %113 {offsets = [8, 0], sizes = [2, 32], strides = [1, 1]} : vector<10x32xf32> to vector<2x32xf32>
    %c0_40 = arith.constant 0 : index
    %c0_41 = arith.constant 0 : index
    %120 = vector.load %arg1[%c0_40, %c0_41] : memref<352x128xf32, #tpu.memory_space<vmem>>, vector<32x33xf32>
    %cst_42 = arith.constant dense<0.000000e+00> : vector<2x33xf32>
    %121 = tpu.matmul %119, %120, %cst_42 {dimension_numbers = #tpu.dot_dimension_numbers<[1], [0], [0], [1], [0, 0, 1, 1], [], []>} : vector<2x32xf32>, vector<32x33xf32>, vector<2x33xf32> -> vector<2x33xf32>
    %c0_43 = arith.constant 0 : index
    %c0_44 = arith.constant 0 : index
    %122 = vector.load %arg2[%c0_43, %c0_44] : memref<16x128xf32, #tpu.memory_space<vmem>>, vector<1x33xf32>
    %123 = vector.broadcast %122 : vector<1x33xf32> to vector<2x33xf32>
    %124 = arith.addf %121, %123 : vector<2x33xf32>
    %125 = tpu.iota {dimensions = array<i32: 1>} : vector<2x16xi32>
    %126 = tpu.iota {dimensions = array<i32: 0>} : vector<2x16xi32>
    %c8_i32 = arith.constant 8 : i32
    %127 = vector.broadcast %c8_i32 : i32 to vector<2x16xi32>
    %128 = arith.muli %126, %127 : vector<2x16xi32>
    %129 = arith.cmpi sge, %125, %128 : vector<2x16xi32>
    %c8_i32_45 = arith.constant 8 : i32
    %130 = vector.broadcast %c8_i32_45 : i32 to vector<2x16xi32>
    %131 = arith.addi %128, %130 : vector<2x16xi32>
    %132 = arith.cmpi slt, %125, %131 : vector<2x16xi32>
    %133 = arith.andi %129, %132 : vector<2x16xi1>
    %134 = arith.extui %133 : vector<2x16xi1> to vector<2x16xi32>
    %135 = arith.sitofp %134 : vector<2x16xi32> to vector<2x16xf32>
    %136 = tpu.iota {dimensions = array<i32: 0>} : vector<16x2xi32>
    %137 = tpu.iota {dimensions = array<i32: 1>} : vector<16x2xi32>
    %c8_i32_46 = arith.constant 8 : i32
    %138 = vector.broadcast %c8_i32_46 : i32 to vector<16x2xi32>
    %139 = arith.muli %137, %138 : vector<16x2xi32>
    %140 = arith.cmpi sge, %136, %139 : vector<16x2xi32>
    %c8_i32_47 = arith.constant 8 : i32
    %141 = vector.broadcast %c8_i32_47 : i32 to vector<16x2xi32>
    %142 = arith.addi %139, %141 : vector<16x2xi32>
    %143 = arith.cmpi slt, %136, %142 : vector<16x2xi32>
    %144 = arith.andi %140, %143 : vector<16x2xi1>
    %145 = arith.extui %144 : vector<16x2xi1> to vector<16x2xi32>
    %146 = arith.sitofp %145 : vector<16x2xi32> to vector<16x2xf32>
    %147 = tpu.iota {dimensions = array<i32: 0>} : vector<10x2xi32>
    %148 = tpu.iota {dimensions = array<i32: 1>} : vector<10x2xi32>
    %c8_i32_48 = arith.constant 8 : i32
    %149 = vector.broadcast %c8_i32_48 : i32 to vector<10x2xi32>
    %150 = arith.addi %148, %149 : vector<10x2xi32>
    %151 = arith.cmpi eq, %147, %150 : vector<10x2xi32>
    %152 = arith.extui %151 : vector<10x2xi1> to vector<10x2xi32>
    %153 = arith.sitofp %152 : vector<10x2xi32> to vector<10x2xf32>
    %cst_49 = arith.constant dense<0.000000e+00> : vector<16x33xf32>
    %154 = tpu.matmul %146, %124, %cst_49 {dimension_numbers = #tpu.dot_dimension_numbers<[1], [0], [0], [1], [0, 0, 1, 1], [], []>} : vector<16x2xf32>, vector<2x33xf32>, vector<16x33xf32> -> vector<16x33xf32>
    %c32 = arith.constant 32 : index
    %c0_50 = arith.constant 0 : index
    %155 = vector.load %arg1[%c32, %c0_50] : memref<352x128xf32, #tpu.memory_space<vmem>>, vector<32x32xf32>
    %cst_51 = arith.constant dense<0.000000e+00> : vector<16x32xf32>
    %156 = tpu.matmul %118, %155, %cst_51 {dimension_numbers = #tpu.dot_dimension_numbers<[1], [0], [0], [1], [0, 0, 1, 1], [], []>} : vector<16x32xf32>, vector<32x32xf32>, vector<16x32xf32> -> vector<16x32xf32>
    %157 = vector.extract_strided_slice %154 {offsets = [0, 0], sizes = [16, 32], strides = [1, 1]} : vector<16x33xf32> to vector<16x32xf32>
    %158 = arith.addf %156, %157 : vector<16x32xf32>
    %cst_52 = arith.constant 0.000000e+00 : f32
    %159 = vector.broadcast %cst_52 : f32 to vector<16x32xf32>
    %160 = arith.maximumf %158, %159 : vector<16x32xf32>
    %c64 = arith.constant 64 : index
    %c0_53 = arith.constant 0 : index
    %161 = vector.load %arg1[%c64, %c0_53] : memref<352x128xf32, #tpu.memory_space<vmem>>, vector<32x32xf32>
    %cst_54 = arith.constant dense<0.000000e+00> : vector<16x32xf32>
    %162 = tpu.matmul %160, %161, %cst_54 {dimension_numbers = #tpu.dot_dimension_numbers<[1], [0], [0], [1], [0, 0, 1, 1], [], []>} : vector<16x32xf32>, vector<32x32xf32>, vector<16x32xf32> -> vector<16x32xf32>
    %c1 = arith.constant 1 : index
    %c0_55 = arith.constant 0 : index
    %163 = vector.load %arg2[%c1, %c0_55] : memref<16x128xf32, #tpu.memory_space<vmem>>, vector<1x32xf32>
    %164 = vector.broadcast %163 : vector<1x32xf32> to vector<16x32xf32>
    %165 = arith.addf %162, %164 : vector<16x32xf32>
    %cst_56 = arith.constant 0.000000e+00 : f32
    %166 = vector.broadcast %cst_56 : f32 to vector<16x32xf32>
    %167 = arith.maximumf %165, %166 : vector<16x32xf32>
    %c96 = arith.constant 96 : index
    %c0_57 = arith.constant 0 : index
    %168 = vector.load %arg1[%c96, %c0_57] : memref<352x128xf32, #tpu.memory_space<vmem>>, vector<32x1xf32>
    %cst_58 = arith.constant dense<0.000000e+00> : vector<16x1xf32>
    %169 = tpu.matmul %167, %168, %cst_58 {dimension_numbers = #tpu.dot_dimension_numbers<[1], [0], [0], [1], [0, 0, 1, 1], [], []>} : vector<16x32xf32>, vector<32x1xf32>, vector<16x1xf32> -> vector<16x1xf32>
    %170 = vector.extract_strided_slice %154 {offsets = [0, 32], sizes = [16, 1], strides = [1, 1]} : vector<16x33xf32> to vector<16x1xf32>
    %171 = arith.addf %169, %170 : vector<16x1xf32>
    %cst_59 = arith.constant 0.000000e+00 : f32
    %172 = vector.broadcast %cst_59 : f32 to vector<16x1xf32>
    %173 = arith.cmpf ogt, %171, %172 : vector<16x1xf32>
    %cst_60 = arith.constant 2.000000e-01 : f32
    %174 = vector.broadcast %cst_60 : f32 to vector<16x1xf32>
    %175 = arith.mulf %174, %171 : vector<16x1xf32>
    %176 = arith.select %173, %171, %175 : vector<16x1xi1>, vector<16x1xf32>
    %cst_61 = arith.constant dense<0xFF800000> : vector<1xf32>
    %177 = vector.multi_reduction <maximumf>, %176, %cst_61 [0] : vector<16x1xf32> to vector<1xf32>
    %178 = vector.shape_cast %177 : vector<1xf32> to vector<1x1xf32>
    %179 = vector.broadcast %178 : vector<1x1xf32> to vector<16x1xf32>
    %180 = arith.subf %176, %179 : vector<16x1xf32>
    %181 = math.exp %180 : vector<16x1xf32>
    %cst_62 = arith.constant dense<0.000000e+00> : vector<2x1xf32>
    %182 = tpu.matmul %135, %181, %cst_62 {dimension_numbers = #tpu.dot_dimension_numbers<[1], [0], [0], [1], [0, 0, 1, 1], [], []>} : vector<2x16xf32>, vector<16x1xf32>, vector<2x1xf32> -> vector<2x1xf32>
    %cst_63 = arith.constant dense<0.000000e+00> : vector<16x1xf32>
    %183 = tpu.matmul %146, %182, %cst_63 {dimension_numbers = #tpu.dot_dimension_numbers<[1], [0], [0], [1], [0, 0, 1, 1], [], []>} : vector<16x2xf32>, vector<2x1xf32>, vector<16x1xf32> -> vector<16x1xf32>
    %cst_64 = arith.constant 8.000000e+00 : f32
    %184 = vector.broadcast %cst_64 : f32 to vector<16x1xf32>
    %185 = arith.mulf %183, %184 : vector<16x1xf32>
    %186 = arith.divf %181, %185 : vector<16x1xf32>
    %187 = vector.broadcast %186 : vector<16x1xf32> to vector<16x32xf32>
    %188 = arith.mulf %187, %167 : vector<16x32xf32>
    %cst_65 = arith.constant dense<0.000000e+00> : vector<2x32xf32>
    %189 = tpu.matmul %135, %188, %cst_65 {dimension_numbers = #tpu.dot_dimension_numbers<[1], [0], [0], [1], [0, 0, 1, 1], [], []>} : vector<2x16xf32>, vector<16x32xf32>, vector<2x32xf32> -> vector<2x32xf32>
    %c160 = arith.constant 160 : index
    %c0_66 = arith.constant 0 : index
    %190 = vector.load %arg1[%c160, %c0_66] : memref<352x128xf32, #tpu.memory_space<vmem>>, vector<32x32xf32>
    %cst_67 = arith.constant dense<0.000000e+00> : vector<10x32xf32>
    %191 = tpu.matmul %113, %190, %cst_67 {dimension_numbers = #tpu.dot_dimension_numbers<[1], [0], [0], [1], [0, 0, 1, 1], [], []>} : vector<10x32xf32>, vector<32x32xf32>, vector<10x32xf32> -> vector<10x32xf32>
    %c2 = arith.constant 2 : index
    %c0_68 = arith.constant 0 : index
    %192 = vector.load %arg2[%c2, %c0_68] : memref<16x128xf32, #tpu.memory_space<vmem>>, vector<1x32xf32>
    %193 = vector.broadcast %192 : vector<1x32xf32> to vector<10x32xf32>
    %194 = arith.addf %191, %193 : vector<10x32xf32>
    %c128 = arith.constant 128 : index
    %c0_69 = arith.constant 0 : index
    %195 = vector.load %arg1[%c128, %c0_69] : memref<352x128xf32, #tpu.memory_space<vmem>>, vector<32x32xf32>
    %cst_70 = arith.constant dense<0.000000e+00> : vector<2x32xf32>
    %196 = tpu.matmul %189, %195, %cst_70 {dimension_numbers = #tpu.dot_dimension_numbers<[1], [0], [0], [1], [0, 0, 1, 1], [], []>} : vector<2x32xf32>, vector<32x32xf32>, vector<2x32xf32> -> vector<2x32xf32>
    %cst_71 = arith.constant dense<0.000000e+00> : vector<10x32xf32>
    %197 = tpu.matmul %153, %196, %cst_71 {dimension_numbers = #tpu.dot_dimension_numbers<[1], [0], [0], [1], [0, 0, 1, 1], [], []>} : vector<10x2xf32>, vector<2x32xf32>, vector<10x32xf32> -> vector<10x32xf32>
    %198 = arith.addf %194, %197 : vector<10x32xf32>
    %cst_72 = arith.constant 0.000000e+00 : f32
    %199 = vector.broadcast %cst_72 : f32 to vector<10x32xf32>
    %200 = arith.maximumf %198, %199 : vector<10x32xf32>
    %c192 = arith.constant 192 : index
    %c0_73 = arith.constant 0 : index
    %201 = vector.load %arg1[%c192, %c0_73] : memref<352x128xf32, #tpu.memory_space<vmem>>, vector<32x32xf32>
    %cst_74 = arith.constant dense<0.000000e+00> : vector<10x32xf32>
    %202 = tpu.matmul %200, %201, %cst_74 {dimension_numbers = #tpu.dot_dimension_numbers<[1], [0], [0], [1], [0, 0, 1, 1], [], []>} : vector<10x32xf32>, vector<32x32xf32>, vector<10x32xf32> -> vector<10x32xf32>
    %c3 = arith.constant 3 : index
    %c0_75 = arith.constant 0 : index
    %203 = vector.load %arg2[%c3, %c0_75] : memref<16x128xf32, #tpu.memory_space<vmem>>, vector<1x32xf32>
    %204 = vector.broadcast %203 : vector<1x32xf32> to vector<10x32xf32>
    %205 = arith.addf %202, %204 : vector<10x32xf32>
    %cst_76 = arith.constant 0.000000e+00 : f32
    %206 = vector.broadcast %cst_76 : f32 to vector<10x32xf32>
    %207 = arith.maximumf %205, %206 : vector<10x32xf32>
    %208 = vector.extract_strided_slice %207 {offsets = [8, 0], sizes = [2, 32], strides = [1, 1]} : vector<10x32xf32> to vector<2x32xf32>
    %c256 = arith.constant 256 : index
    %c0_77 = arith.constant 0 : index
    %209 = vector.load %arg1[%c256, %c0_77] : memref<352x128xf32, #tpu.memory_space<vmem>>, vector<32x128xf32>
    %cst_78 = arith.constant dense<0.000000e+00> : vector<2x128xf32>
    %210 = tpu.matmul %208, %209, %cst_78 {dimension_numbers = #tpu.dot_dimension_numbers<[1], [0], [0], [1], [0, 0, 1, 1], [], []>} : vector<2x32xf32>, vector<32x128xf32>, vector<2x128xf32> -> vector<2x128xf32>
    %c11 = arith.constant 11 : index
    %c0_79 = arith.constant 0 : index
    %211 = vector.load %arg2[%c11, %c0_79] : memref<16x128xf32, #tpu.memory_space<vmem>>, vector<1x128xf32>
    %212 = vector.broadcast %211 : vector<1x128xf32> to vector<2x128xf32>
    %213 = arith.addf %210, %212 : vector<2x128xf32>
    %214 = vector.extract_strided_slice %213 {offsets = [0, 0], sizes = [2, 64], strides = [1, 1]} : vector<2x128xf32> to vector<2x64xf32>
    %215 = vector.extract_strided_slice %213 {offsets = [0, 64], sizes = [2, 64], strides = [1, 1]} : vector<2x128xf32> to vector<2x64xf32>
    %c288 = arith.constant 288 : index
    %c0_80 = arith.constant 0 : index
    %216 = vector.load %arg1[%c288, %c0_80] : memref<352x128xf32, #tpu.memory_space<vmem>>, vector<16x64xf32>
    %c304 = arith.constant 304 : index
    %c0_81 = arith.constant 0 : index
    %217 = vector.load %arg1[%c304, %c0_81] : memref<352x128xf32, #tpu.memory_space<vmem>>, vector<16x64xf32>
    %218 = tpu.iota {dimensions = array<i32: 0>} : vector<2x1xi32>
    %219 = vector.extract_strided_slice %214 {offsets = [0, 0], sizes = [1, 64], strides = [1, 1]} : vector<2x64xf32> to vector<1x64xf32>
    %220 = vector.extract_strided_slice %219 {offsets = [0, 0], sizes = [1, 48], strides = [1, 1]} : vector<1x64xf32> to vector<1x48xf32>
    %cst_82 = arith.constant 5.000000e-01 : f32
    %221 = vector.broadcast %cst_82 : f32 to vector<1x48xf32>
    %222 = arith.mulf %221, %220 : vector<1x48xf32>
    %223 = math.tanh %222 : vector<1x48xf32>
    %cst_83 = arith.constant 5.000000e-01 : f32
    %224 = vector.broadcast %cst_83 : f32 to vector<1x48xf32>
    %225 = arith.mulf %224, %223 : vector<1x48xf32>
    %cst_84 = arith.constant 5.000000e-01 : f32
    %226 = vector.broadcast %cst_84 : f32 to vector<1x48xf32>
    %227 = arith.addf %225, %226 : vector<1x48xf32>
    %228 = vector.extract_strided_slice %219 {offsets = [0, 48], sizes = [1, 16], strides = [1, 1]} : vector<1x64xf32> to vector<1x16xf32>
    %229 = math.tanh %228 : vector<1x16xf32>
    %230 = vector.extract_strided_slice %227 {offsets = [0, 0], sizes = [1, 16], strides = [1, 1]} : vector<1x48xf32> to vector<1x16xf32>
    %231 = arith.mulf %230, %229 : vector<1x16xf32>
    %232 = vector.extract_strided_slice %227 {offsets = [0, 32], sizes = [1, 16], strides = [1, 1]} : vector<1x48xf32> to vector<1x16xf32>
    %233 = math.tanh %231 : vector<1x16xf32>
    %234 = arith.mulf %232, %233 : vector<1x16xf32>
    %c0_i32 = arith.constant 0 : i32
    %235 = vector.broadcast %c0_i32 : i32 to vector<2x1xi32>
    %236 = arith.cmpi eq, %218, %235 : vector<2x1xi32>
    %237 = arith.extui %236 : vector<2x1xi1> to vector<2x1xi32>
    %238 = arith.sitofp %237 : vector<2x1xi32> to vector<2x1xf32>
    %239 = vector.broadcast %238 : vector<2x1xf32> to vector<2x16xf32>
    %240 = vector.broadcast %234 : vector<1x16xf32> to vector<2x16xf32>
    %241 = arith.mulf %239, %240 : vector<2x16xf32>
    %242 = vector.extract_strided_slice %214 {offsets = [1, 0], sizes = [1, 64], strides = [1, 1]} : vector<2x64xf32> to vector<1x64xf32>
    %cst_85 = arith.constant dense<0.000000e+00> : vector<1x64xf32>
    %243 = tpu.matmul %234, %216, %cst_85 {dimension_numbers = #tpu.dot_dimension_numbers<[1], [0], [0], [1], [0, 0, 1, 1], [], []>} : vector<1x16xf32>, vector<16x64xf32>, vector<1x64xf32> -> vector<1x64xf32>
    %244 = arith.addf %242, %243 : vector<1x64xf32>
    %245 = vector.extract_strided_slice %244 {offsets = [0, 0], sizes = [1, 48], strides = [1, 1]} : vector<1x64xf32> to vector<1x48xf32>
    %cst_86 = arith.constant 5.000000e-01 : f32
    %246 = vector.broadcast %cst_86 : f32 to vector<1x48xf32>
    %247 = arith.mulf %246, %245 : vector<1x48xf32>
    %248 = math.tanh %247 : vector<1x48xf32>
    %cst_87 = arith.constant 5.000000e-01 : f32
    %249 = vector.broadcast %cst_87 : f32 to vector<1x48xf32>
    %250 = arith.mulf %249, %248 : vector<1x48xf32>
    %cst_88 = arith.constant 5.000000e-01 : f32
    %251 = vector.broadcast %cst_88 : f32 to vector<1x48xf32>
    %252 = arith.addf %250, %251 : vector<1x48xf32>
    %253 = vector.extract_strided_slice %244 {offsets = [0, 48], sizes = [1, 16], strides = [1, 1]} : vector<1x64xf32> to vector<1x16xf32>
    %254 = math.tanh %253 : vector<1x16xf32>
    %255 = vector.extract_strided_slice %252 {offsets = [0, 16], sizes = [1, 16], strides = [1, 1]} : vector<1x48xf32> to vector<1x16xf32>
    %256 = arith.mulf %255, %231 : vector<1x16xf32>
    %257 = vector.extract_strided_slice %252 {offsets = [0, 0], sizes = [1, 16], strides = [1, 1]} : vector<1x48xf32> to vector<1x16xf32>
    %258 = arith.mulf %257, %254 : vector<1x16xf32>
    %259 = arith.addf %256, %258 : vector<1x16xf32>
    %260 = vector.extract_strided_slice %252 {offsets = [0, 32], sizes = [1, 16], strides = [1, 1]} : vector<1x48xf32> to vector<1x16xf32>
    %261 = math.tanh %259 : vector<1x16xf32>
    %262 = arith.mulf %260, %261 : vector<1x16xf32>
    %c1_i32 = arith.constant 1 : i32
    %263 = vector.broadcast %c1_i32 : i32 to vector<2x1xi32>
    %264 = arith.cmpi eq, %218, %263 : vector<2x1xi32>
    %265 = arith.extui %264 : vector<2x1xi1> to vector<2x1xi32>
    %266 = arith.sitofp %265 : vector<2x1xi32> to vector<2x1xf32>
    %267 = vector.broadcast %266 : vector<2x1xf32> to vector<2x16xf32>
    %268 = vector.broadcast %262 : vector<1x16xf32> to vector<2x16xf32>
    %269 = arith.mulf %267, %268 : vector<2x16xf32>
    %270 = arith.addf %241, %269 : vector<2x16xf32>
    %271 = vector.extract_strided_slice %215 {offsets = [1, 0], sizes = [1, 64], strides = [1, 1]} : vector<2x64xf32> to vector<1x64xf32>
    %272 = vector.extract_strided_slice %271 {offsets = [0, 0], sizes = [1, 48], strides = [1, 1]} : vector<1x64xf32> to vector<1x48xf32>
    %cst_89 = arith.constant 5.000000e-01 : f32
    %273 = vector.broadcast %cst_89 : f32 to vector<1x48xf32>
    %274 = arith.mulf %273, %272 : vector<1x48xf32>
    %275 = math.tanh %274 : vector<1x48xf32>
    %cst_90 = arith.constant 5.000000e-01 : f32
    %276 = vector.broadcast %cst_90 : f32 to vector<1x48xf32>
    %277 = arith.mulf %276, %275 : vector<1x48xf32>
    %cst_91 = arith.constant 5.000000e-01 : f32
    %278 = vector.broadcast %cst_91 : f32 to vector<1x48xf32>
    %279 = arith.addf %277, %278 : vector<1x48xf32>
    %280 = vector.extract_strided_slice %271 {offsets = [0, 48], sizes = [1, 16], strides = [1, 1]} : vector<1x64xf32> to vector<1x16xf32>
    %281 = math.tanh %280 : vector<1x16xf32>
    %282 = vector.extract_strided_slice %279 {offsets = [0, 0], sizes = [1, 16], strides = [1, 1]} : vector<1x48xf32> to vector<1x16xf32>
    %283 = arith.mulf %282, %281 : vector<1x16xf32>
    %284 = vector.extract_strided_slice %279 {offsets = [0, 32], sizes = [1, 16], strides = [1, 1]} : vector<1x48xf32> to vector<1x16xf32>
    %285 = math.tanh %283 : vector<1x16xf32>
    %286 = arith.mulf %284, %285 : vector<1x16xf32>
    %c1_i32_92 = arith.constant 1 : i32
    %287 = vector.broadcast %c1_i32_92 : i32 to vector<2x1xi32>
    %288 = arith.cmpi eq, %218, %287 : vector<2x1xi32>
    %289 = arith.extui %288 : vector<2x1xi1> to vector<2x1xi32>
    %290 = arith.sitofp %289 : vector<2x1xi32> to vector<2x1xf32>
    %291 = vector.broadcast %290 : vector<2x1xf32> to vector<2x16xf32>
    %292 = vector.broadcast %286 : vector<1x16xf32> to vector<2x16xf32>
    %293 = arith.mulf %291, %292 : vector<2x16xf32>
    %294 = vector.extract_strided_slice %215 {offsets = [0, 0], sizes = [1, 64], strides = [1, 1]} : vector<2x64xf32> to vector<1x64xf32>
    %cst_93 = arith.constant dense<0.000000e+00> : vector<1x64xf32>
    %295 = tpu.matmul %286, %217, %cst_93 {dimension_numbers = #tpu.dot_dimension_numbers<[1], [0], [0], [1], [0, 0, 1, 1], [], []>} : vector<1x16xf32>, vector<16x64xf32>, vector<1x64xf32> -> vector<1x64xf32>
    %296 = arith.addf %294, %295 : vector<1x64xf32>
    %297 = vector.extract_strided_slice %296 {offsets = [0, 0], sizes = [1, 48], strides = [1, 1]} : vector<1x64xf32> to vector<1x48xf32>
    %cst_94 = arith.constant 5.000000e-01 : f32
    %298 = vector.broadcast %cst_94 : f32 to vector<1x48xf32>
    %299 = arith.mulf %298, %297 : vector<1x48xf32>
    %300 = math.tanh %299 : vector<1x48xf32>
    %cst_95 = arith.constant 5.000000e-01 : f32
    %301 = vector.broadcast %cst_95 : f32 to vector<1x48xf32>
    %302 = arith.mulf %301, %300 : vector<1x48xf32>
    %cst_96 = arith.constant 5.000000e-01 : f32
    %303 = vector.broadcast %cst_96 : f32 to vector<1x48xf32>
    %304 = arith.addf %302, %303 : vector<1x48xf32>
    %305 = vector.extract_strided_slice %296 {offsets = [0, 48], sizes = [1, 16], strides = [1, 1]} : vector<1x64xf32> to vector<1x16xf32>
    %306 = math.tanh %305 : vector<1x16xf32>
    %307 = vector.extract_strided_slice %304 {offsets = [0, 16], sizes = [1, 16], strides = [1, 1]} : vector<1x48xf32> to vector<1x16xf32>
    %308 = arith.mulf %307, %283 : vector<1x16xf32>
    %309 = vector.extract_strided_slice %304 {offsets = [0, 0], sizes = [1, 16], strides = [1, 1]} : vector<1x48xf32> to vector<1x16xf32>
    %310 = arith.mulf %309, %306 : vector<1x16xf32>
    %311 = arith.addf %308, %310 : vector<1x16xf32>
    %312 = vector.extract_strided_slice %304 {offsets = [0, 32], sizes = [1, 16], strides = [1, 1]} : vector<1x48xf32> to vector<1x16xf32>
    %313 = math.tanh %311 : vector<1x16xf32>
    %314 = arith.mulf %312, %313 : vector<1x16xf32>
    %c0_i32_97 = arith.constant 0 : i32
    %315 = vector.broadcast %c0_i32_97 : i32 to vector<2x1xi32>
    %316 = arith.cmpi eq, %218, %315 : vector<2x1xi32>
    %317 = arith.extui %316 : vector<2x1xi1> to vector<2x1xi32>
    %318 = arith.sitofp %317 : vector<2x1xi32> to vector<2x1xf32>
    %319 = vector.broadcast %318 : vector<2x1xf32> to vector<2x16xf32>
    %320 = vector.broadcast %314 : vector<1x16xf32> to vector<2x16xf32>
    %321 = arith.mulf %319, %320 : vector<2x16xf32>
    %322 = arith.addf %293, %321 : vector<2x16xf32>
    %c320 = arith.constant 320 : index
    %c0_98 = arith.constant 0 : index
    %323 = vector.load %arg1[%c320, %c0_98] : memref<352x128xf32, #tpu.memory_space<vmem>>, vector<32x128xf32>
    %c4_99 = arith.constant 4 : index
    %c0_100 = arith.constant 0 : index
    %324 = vector.load %arg2[%c4_99, %c0_100] : memref<16x128xf32, #tpu.memory_space<vmem>>, vector<1x128xf32>
    %325 = vector.extract_strided_slice %207 {offsets = [0, 0], sizes = [8, 32], strides = [1, 1]} : vector<10x32xf32> to vector<8x32xf32>
    %cst_101 = arith.constant dense<0.000000e+00> : vector<8x128xf32>
    %326 = tpu.matmul %325, %323, %cst_101 {dimension_numbers = #tpu.dot_dimension_numbers<[1], [0], [0], [1], [0, 0, 1, 1], [], []>} : vector<8x32xf32>, vector<32x128xf32>, vector<8x128xf32> -> vector<8x128xf32>
    %327 = vector.broadcast %324 : vector<1x128xf32> to vector<8x128xf32>
    %328 = arith.addf %326, %327 : vector<8x128xf32>
    %cst_102 = arith.constant 5.000000e-01 : f32
    %329 = vector.broadcast %cst_102 : f32 to vector<8x128xf32>
    %330 = arith.mulf %329, %328 : vector<8x128xf32>
    %331 = math.tanh %330 : vector<8x128xf32>
    %cst_103 = arith.constant 5.000000e-01 : f32
    %332 = vector.broadcast %cst_103 : f32 to vector<8x128xf32>
    %333 = arith.mulf %332, %331 : vector<8x128xf32>
    %cst_104 = arith.constant 5.000000e-01 : f32
    %334 = vector.broadcast %cst_104 : f32 to vector<8x128xf32>
    %335 = arith.addf %333, %334 : vector<8x128xf32>
    %c0_105 = arith.constant 0 : index
    %c0_106 = arith.constant 0 : index
    %336 = vector.load %arg3[%c0_105, %c0_106] : memref<10x128xf32, #tpu.memory_space<vmem>>, vector<8x128xf32>
    tpu.vector_store %arg3[%c0_105, %c0_106], %335 {strides = array<i32>} : memref<10x128xf32, #tpu.memory_space<vmem>>, vector<8x128xf32>,
    %337 = vector.extract_strided_slice %323 {offsets = [0, 0], sizes = [16, 128], strides = [1, 1]} : vector<32x128xf32> to vector<16x128xf32>
    %cst_107 = arith.constant dense<0.000000e+00> : vector<2x128xf32>
    %338 = tpu.matmul %270, %337, %cst_107 {dimension_numbers = #tpu.dot_dimension_numbers<[1], [0], [0], [1], [0, 0, 1, 1], [], []>} : vector<2x16xf32>, vector<16x128xf32>, vector<2x128xf32> -> vector<2x128xf32>
    %339 = vector.extract_strided_slice %323 {offsets = [16, 0], sizes = [16, 128], strides = [1, 1]} : vector<32x128xf32> to vector<16x128xf32>
    %cst_108 = arith.constant dense<0.000000e+00> : vector<2x128xf32>
    %340 = tpu.matmul %322, %339, %cst_108 {dimension_numbers = #tpu.dot_dimension_numbers<[1], [0], [0], [1], [0, 0, 1, 1], [], []>} : vector<2x16xf32>, vector<16x128xf32>, vector<2x128xf32> -> vector<2x128xf32>
    %341 = arith.addf %338, %340 : vector<2x128xf32>
    %342 = vector.broadcast %324 : vector<1x128xf32> to vector<2x128xf32>
    %343 = arith.addf %341, %342 : vector<2x128xf32>
    %cst_109 = arith.constant 5.000000e-01 : f32
    %344 = vector.broadcast %cst_109 : f32 to vector<2x128xf32>
    %345 = arith.mulf %344, %343 : vector<2x128xf32>
    %346 = math.tanh %345 : vector<2x128xf32>
    %cst_110 = arith.constant 5.000000e-01 : f32
    %347 = vector.broadcast %cst_110 : f32 to vector<2x128xf32>
    %348 = arith.mulf %347, %346 : vector<2x128xf32>
    %cst_111 = arith.constant 5.000000e-01 : f32
    %349 = vector.broadcast %cst_111 : f32 to vector<2x128xf32>
    %350 = arith.addf %348, %349 : vector<2x128xf32>
    %c8_112 = arith.constant 8 : index
    %c0_113 = arith.constant 0 : index
    %351 = vector.load %arg3[%c8_112, %c0_113] : memref<10x128xf32, #tpu.memory_space<vmem>>, vector<2x128xf32>
    tpu.vector_store %arg3[%c8_112, %c0_113], %350 {strides = array<i32>} : memref<10x128xf32, #tpu.memory_space<vmem>>, vector<2x128xf32>,
    return
  }
}

</mosaic_0001>

<llo_original>
// kernel: _lambda_.1
$region0: #{_lambda_.1}
  #allocation0 [shape = 'u32[]', space=smem, size = 0x4, offset = 0x4, fixed_abs, tag = 'smem constant byte address 0x4 - core index']
  #allocation1 [shape = 'u32[72,128]{1,0:T(1,128)}', space=vmem, size = 0x9000, scoped, tag = 'internal scratch']
  #allocation2 [shape = 'f32[10,32]{1,0:T(8,128)}', space=vmem, size = 0x2000, scoped, tag = 'scratch operand']
  #allocation3 [shape = 'f32[16,32]{1,0:T(8,128)}', space=vmem, size = 0x2000, scoped, tag = 'scratch operand']
  %s0 = inlined_call_operand.vmem [shape: f32[10,2], index: 0, kind: input, shape index: {}]
  %s1 = inlined_call_operand.vmem [shape: f32[352,128], index: 1, kind: input, shape index: {}]
  %s2 = inlined_call_operand.vmem [shape: f32[16,128], index: 2, kind: input, shape index: {}]
  %s3 = inlined_call_operand.vmem [shape: f32[10,128], index: 3, kind: output, shape index: {}]
  %s4 = sld [smem:[#allocation0]]
  $region22: #{_lambda_.1} parent=0
    _
  %s6 = ssub.s32 1, %s4
  %s7 = scalar_select 0, %s6, %s4
  // Predicated region
  $region2: #{_lambda_.1} parent=0 // pred_check
    _
  $region3: #{_lambda_.1} parent=0 // pred_check_branch
    %9 = sbr.rel (0) target = $region5
  $region4: #{_lambda_.1} parent=0 // pred_region
    _
  $region5: #{_lambda_.1} parent=0 // pred_fallthru
    _
  // Predicated region
  $region6: #{_lambda_.1} parent=0 // pred_check
    _
  $region7: #{_lambda_.1} parent=0 // pred_check_branch
    %11 = sbr.rel (0) target = $region9
  $region8: #{_lambda_.1} parent=0 // pred_region
    _
  $region9: #{_lambda_.1} parent=0 // pred_fallthru
    _
  // Predicated region
  $region10: #{_lambda_.1} parent=0 // pred_check
    _
  $region11: #{_lambda_.1} parent=0 // pred_check_branch
    %13 = sbr.rel (0) target = $region13
  $region12: #{_lambda_.1} parent=0 // pred_region
    _
  $region13: #{_lambda_.1} parent=0 // pred_fallthru
    _
  %v14 = vld [vmem:[%s0] sm:$0xff]
  %v15 = vld [vmem:[%s2 + $0x8] sm:$0x1]
  %17 = vset.pattern.permute.xlu0 0
  %18 = vperm.xlu0 %17, %v14
  %v19 = vpop.permute.xlu0 %18
  %v21 = vperm.slane %v15, 0
  %v22 = vmul.f32 %v19, %v21
  %v23 = vld [vmem:[%s2 + $0x9] sm:$0x1]
  %24 = vset.pattern.permute.xlu0 1
  %25 = vperm.xlu0 %24, %v14
  %v26 = vpop.permute.xlu0 %25
  %v28 = vperm.slane %v23, 0
  %v29 = vmul.f32 %v26, %v28
  %v30 = vadd.f32 %v22, %v29
  %v31 = vld [vmem:[%s2 + $0xa] sm:$0x1]
  %v32 = vperm.slane %v31, 0
  %v33 = vadd.f32 %v30, %v32
  %v34 = vld [vmem:[%s1 + $0xe0] sm:$0xff]
  %v35 = vld [vmem:[%s1 + $0xe8] sm:$0xff]
  %v36 = vld [vmem:[%s1 + $0xf0] sm:$0xff]
  %v37 = vld [vmem:[%s1 + $0xf8] sm:$0xff]
  %v38 = vmul.f32 %v33, 0.5
  %v39 = vtanh.pop %v38
  %v40 = vmul.f32 %v39, 0.5
  %v41 = vadd.f32 %v40, 0.5
  %v42 = vtanh.pop %v33
  %44 = vrot.lane.b32.xlu0 %v42, 80
  %v45 = vpop.permute.xlu0 %44
  %v47 = vmul.f32 %v41, %v45
  %v48 = vtanh.pop %v47
  %50 = vrot.lane.b32.xlu0 %v48, 32
  %v51 = vpop.permute.xlu0 %50
  %v53 = vmul.f32 %v41, %v51
  %55 = vrot.lane.b32.xlu0 %v53, 96
  %v56 = vpop.permute.xlu0 %55
  %vm57 = vcmask 130048
  %v58 = vsel %vm57, %v56, 0
  %60 = vmatpush.msra.mxu0 0.0
  %61 = vmatpush.msra.mxu0 0.0
  %62 = vmatpush.msra.mxu0 0.0
  %63 = vmatpush.msra.mxu0 0.0
  %64 = vmatpush.msra.mxu0 0.0
  %65 = vmatpush.msra.mxu0 0.0
  %66 = vmatpush.msra.mxu0 0.0
  %67 = vmatpush.msra.mxu0 0.0
  %68 = vmatpush.msra.mxu0 0.0
  %69 = vmatpush.msra.mxu0 0.0
  %70 = vmatpush.msra.mxu0 0.0
  %71 = vmatpush.msra.mxu0 0.0
  %72 = vmatpush.msra.mxu0 0.0
  %73 = vmatpush.msra.mxu0 0.0
  %74 = vmatpush.msra.mxu0 %v35
  %75 = vmatpush.msra.mxu0 %v34
  %76 = vmatmul.f32.gmra.mxu0 %v58
  %v77 = vpop.f32.mrf.mxu0
  %v78 = vadd.f32 0.0, %v77
  %79 = vdwg.mxu0
  %v81 = vrot.slane %v78, 4
  %v83 = vadd.f32 %v33, %v81
  %v84 = vmul.f32 %v83, 0.5
  %v85 = vtanh.pop %v84
  %v86 = vmul.f32 %v85, 0.5
  %v87 = vadd.f32 %v86, 0.5
  %v88 = vtanh.pop %v83
  %v90 = vrot.slane %v47, 4
  %91 = vrot.lane.b32.xlu0 %v90, 16
  %v92 = vpop.permute.xlu0 %91
  %v94 = vmul.f32 %v87, %v92
  %96 = vrot.lane.b32.xlu0 %v88, 80
  %v97 = vpop.permute.xlu0 %96
  %v99 = vmul.f32 %v87, %v97
  %101 = vrot.lane.b32.xlu0 %v99, 16
  %v102 = vpop.permute.xlu0 %101
  %v104 = vadd.f32 %v94, %v102
  %v105 = vtanh.pop %v104
  %107 = vrot.lane.b32.xlu0 %v105, 16
  %v108 = vpop.permute.xlu0 %107
  %v110 = vmul.f32 %v87, %v108
  %v111 = vrot.slane %v53, 4
  %112 = vrot.lane.b32.xlu0 %v111, 32
  %v113 = vpop.permute.xlu0 %112
  %v114 = vsel %vm57, %v113, 0
  %116 = vmatpush.msra.mxu0 0.0
  %117 = vmatpush.msra.mxu0 0.0
  %118 = vmatpush.msra.mxu0 0.0
  %119 = vmatpush.msra.mxu0 0.0
  %120 = vmatpush.msra.mxu0 0.0
  %121 = vmatpush.msra.mxu0 0.0
  %122 = vmatpush.msra.mxu0 0.0
  %123 = vmatpush.msra.mxu0 0.0
  %124 = vmatpush.msra.mxu0 0.0
  %125 = vmatpush.msra.mxu0 0.0
  %126 = vmatpush.msra.mxu0 0.0
  %127 = vmatpush.msra.mxu0 0.0
  %128 = vmatpush.msra.mxu0 0.0
  %129 = vmatpush.msra.mxu0 0.0
  %130 = vmatpush.msra.mxu0 %v37
  %131 = vmatpush.msra.mxu0 %v36
  %132 = vmatmul.f32.gmra.mxu0 %v114
  %v133 = vpop.f32.mrf.mxu0
  %v134 = vadd.f32 0.0, %v133
  %135 = vdwg.mxu0
  %137 = vrot.lane.b32.xlu0 %v134, 64
  %v138 = vpop.permute.xlu0 %137
  %v140 = vadd.f32 %v33, %v138
  %v141 = vmul.f32 %v140, 0.5
  %v142 = vtanh.pop %v141
  %v143 = vmul.f32 %v142, 0.5
  %v144 = vadd.f32 %v143, 0.5
  %v145 = vtanh.pop %v140
  %v146 = vmul.f32 %v144, %v92
  %148 = vrot.lane.b32.xlu0 %v145, 80
  %v149 = vpop.permute.xlu0 %148
  %v151 = vmul.f32 %v144, %v149
  %153 = vrot.lane.b32.xlu0 %v151, 16
  %v154 = vpop.permute.xlu0 %153
  %v156 = vadd.f32 %v146, %v154
  %v157 = vtanh.pop %v156
  %159 = vrot.lane.b32.xlu0 %v157, 16
  %v160 = vpop.permute.xlu0 %159
  %v162 = vmul.f32 %v144, %v160
  %v163 = vld [vmem:[%s0 + $0x8] sm:$0x3]
  %v164 = vld [vmem:[%s2 + $0x6] sm:$0x1]
  %166 = vset.pattern.permute.xlu0 0
  %167 = vperm.xlu0 %166, %v163
  %v168 = vpop.permute.xlu0 %167
  %v170 = vperm.slane %v164, 0
  %v171 = vmul.f32 %v168, %v170
  %v172 = vld [vmem:[%s2 + $0x7] sm:$0x1]
  %173 = vset.pattern.permute.xlu0 1
  %174 = vperm.xlu0 %173, %v163
  %v175 = vpop.permute.xlu0 %174
  %v177 = vperm.slane %v172, 0
  %v178 = vmul.f32 %v175, %v177
  %v179 = vadd.f32 %v171, %v178
  %v180 = vld [vmem:[%s2 + $0x5] sm:$0x1]
  %v181 = vperm.slane %v180, 0
  %v182 = vadd.f32 %v179, %v181
  %vm184 = vcmask 125952
  %185 = vst.msk [vmem:[#allocation2] sm:$0xf] %vm184, %v56
  %187 = vrot.lane.b32.xlu0 %v162, 48
  %v188 = vpop.permute.xlu0 %187
  %vm190 = vcmask 257152
  %191 = vst.msk [vmem:[#allocation2] sm:$0xf] %vm190, %v188
  %193 = vrot.lane.b32.xlu0 %v110, 96
  %v194 = vpop.permute.xlu0 %193
  %vm196 = vcmask 130052
  %197 = vst.msk [vmem:[#allocation2] sm:$0xf0] %vm196, %v194
  %198 = vrot.lane.b32.xlu0 %v53, 48
  %v199 = vpop.permute.xlu0 %198
  %vm201 = vcmask 261252
  %202 = vst.msk [vmem:[#allocation2] sm:$0xf0] %vm201, %v199
  %vm203 = vcmask 254976
  %204 = vst.msk [vmem:[#allocation2 + $0x8] sm:$0x3] %vm203, %v182
  %v205 = vld [vmem:[#allocation2] sm:$0xff]
  %v206 = vld [vmem:[#allocation2 + $0x8] sm:$0x3]
  %vm207 = vcmask 261120
  %208 = vst.msk [vmem:[#allocation3] sm:$0xff] %vm207, %v205
  %209 = vst.msk [vmem:[#allocation3 + $0x8] sm:$0xff] %vm207, %v205
  %v210 = vld [vmem:[#allocation3] sm:$0xff]
  %v211 = vld [vmem:[#allocation3 + $0x8] sm:$0xff]
  %v212 = vld [vmem:[%s1] sm:$0xff]
  %v213 = vld [vmem:[%s1 + $0x8] sm:$0xff]
  %v214 = vld [vmem:[%s1 + $0x10] sm:$0xff]
  %v215 = vld [vmem:[%s1 + $0x18] sm:$0xff]
  %v216 = vld [vmem:[%s2] sm:$0x1]
  %v217 = vperm.slane %v216, 0
  %v219 = vsel %vm207, %v206, 0
  %221 = vmatpush.msra.mxu0 0.0
  %222 = vmatpush.msra.mxu0 0.0
  %223 = vmatpush.msra.mxu0 0.0
  %224 = vmatpush.msra.mxu0 0.0
  %225 = vmatpush.msra.mxu0 0.0
  %226 = vmatpush.msra.mxu0 0.0
  %227 = vmatpush.msra.mxu0 0.0
  %228 = vmatpush.msra.mxu0 0.0
  %229 = vmatpush.msra.mxu0 0.0
  %230 = vmatpush.msra.mxu0 0.0
  %231 = vmatpush.msra.mxu0 0.0
  %232 = vmatpush.msra.mxu0 0.0
  %233 = vmatpush.msra.mxu0 %v215
  %234 = vmatpush.msra.mxu0 %v214
  %235 = vmatpush.msra.mxu0 %v213
  %236 = vmatpush.msra.mxu0 %v212
  %237 = vmatmul.f32.gmra.mxu0 %v219
  %v238 = vpop.f32.mrf.mxu0
  %v239 = vadd.f32 %v217, %v238
  %240 = vdwg.mxu0
  %v241 = vlaneseq
  %v242 = vand.u32 %v241, 127
  %v243 = vlaneseq
  %v244 = vshrl.u32 %v243, 7
  %v245 = vmul.u32 %v244, 8
  %vm246 = vcmp.ge.s32.totalorder %v242, %v245
  %v247 = vadd.s32 %v245, 8
  %vm248 = vcmp.lt.s32.totalorder %v242, %v247
  %vm249 = vmand %vm246, %vm248
  %v250 = vsel %vm249, 1, 0
  %v251 = vcvt.s32.f32 %v250
  %v252 = vadd.s32 %v244, 8
  %v253 = vmul.u32 %v242, 8
  %vm254 = vcmp.ge.s32.totalorder %v244, %v253
  %vm255 = vcmp.ge.s32.totalorder %v252, %v253
  %v256 = vadd.s32 %v253, 8
  %vm257 = vcmp.lt.s32.totalorder %v244, %v256
  %vm258 = vcmp.lt.s32.totalorder %v252, %v256
  %vm259 = vmand %vm254, %vm257
  %vm260 = vmand %vm255, %vm258
  %v261 = vsel %vm259, 1, 0
  %v262 = vsel %vm260, 1, 0
  %v263 = vcvt.s32.f32 %v261
  %v264 = vcvt.s32.f32 %v262
  %v265 = vadd.s32 %v242, 8
  %vm266 = vcmp.eq.s32.totalorder %v244, %v265
  %vm267 = vcmp.eq.s32.totalorder %v252, %v265
  %v268 = vsel %vm266, 1, 0
  %v269 = vsel %vm267, 1, 0
  %v270 = vcvt.s32.f32 %v268
  %v271 = vcvt.s32.f32 %v269
  %vm272 = vcmask 15360
  %v274 = vsel %vm272, %v263, 0
  %v277 = vsel %vm272, %v264, 0
  %vm279 = vcmask 1041408
  %v281 = vsel %vm279, %v239, 0
  %283 = vmatpush.msra.mxu0 0.0
  %284 = vmatpush.msra.mxu0 0.0
  %285 = vmatpush.msra.mxu0 0.0
  %286 = vmatpush.msra.mxu0 0.0
  %287 = vmatpush.msra.mxu0 0.0
  %288 = vmatpush.msra.mxu0 0.0
  %289 = vmatpush.msra.mxu0 0.0
  %290 = vmatpush.msra.mxu0 0.0
  %291 = vmatpush.msra.mxu0 0.0
  %292 = vmatpush.msra.mxu0 0.0
  %293 = vmatpush.msra.mxu0 0.0
  %294 = vmatpush.msra.mxu0 0.0
  %295 = vmatpush.msra.mxu0 0.0
  %296 = vmatpush.msra.mxu0 0.0
  %297 = vmatpush.msra.mxu0 0.0
  %298 = vmatpush.msra.mxu0 %v281
  %299 = vmatmul.f32.gmra.mxu0 %v274
  %v300 = vpop.f32.mrf.mxu0
  %v301 = vadd.f32 0.0, %v300
  %302 = vmatmul.f32.gmra.mxu0 %v277
  %v303 = vpop.f32.mrf.mxu0
  %v304 = vadd.f32 0.0, %v303
  %305 = vdwg.mxu0
  %v306 = vld [vmem:[%s1 + $0x20] sm:$0xff]
  %v307 = vld [vmem:[%s1 + $0x28] sm:$0xff]
  %v308 = vld [vmem:[%s1 + $0x30] sm:$0xff]
  %v309 = vld [vmem:[%s1 + $0x38] sm:$0xff]
  %v311 = vsel %vm207, %v210, 0
  %v314 = vsel %vm207, %v211, 0
  %316 = vmatpush.msra.mxu0 0.0
  %317 = vmatpush.msra.mxu0 0.0
  %318 = vmatpush.msra.mxu0 0.0
  %319 = vmatpush.msra.mxu0 0.0
  %320 = vmatpush.msra.mxu0 0.0
  %321 = vmatpush.msra.mxu0 0.0
  %322 = vmatpush.msra.mxu0 0.0
  %323 = vmatpush.msra.mxu0 0.0
  %324 = vmatpush.msra.mxu0 0.0
  %325 = vmatpush.msra.mxu0 0.0
  %326 = vmatpush.msra.mxu0 0.0
  %327 = vmatpush.msra.mxu0 0.0
  %328 = vmatpush.msra.mxu0 %v309
  %329 = vmatpush.msra.mxu0 %v308
  %330 = vmatpush.msra.mxu0 %v307
  %331 = vmatpush.msra.mxu0 %v306
  %332 = vmatmul.f32.gmra.mxu0 %v311
  %v333 = vpop.f32.mrf.mxu0
  %v334 = vadd.f32 %v301, %v333
  %335 = vmatmul.f32.gmra.mxu0 %v314
  %v336 = vpop.f32.mrf.mxu0
  %v337 = vadd.f32 %v304, %v336
  %338 = vdwg.mxu0
  %v339 = vmax.f32 %v334, 0.0
  %v340 = vmax.f32 %v337, 0.0
  %v341 = vld [vmem:[%s1 + $0x40] sm:$0xff]
  %v342 = vld [vmem:[%s1 + $0x48] sm:$0xff]
  %v343 = vld [vmem:[%s1 + $0x50] sm:$0xff]
  %v344 = vld [vmem:[%s1 + $0x58] sm:$0xff]
  %v345 = vld [vmem:[%s2 + $0x1] sm:$0x1]
  %v346 = vperm.slane %v345, 0
  %v348 = vsel %vm207, %v339, 0
  %v351 = vsel %vm207, %v340, 0
  %353 = vmatpush.msra.mxu0 0.0
  %354 = vmatpush.msra.mxu0 0.0
  %355 = vmatpush.msra.mxu0 0.0
  %356 = vmatpush.msra.mxu0 0.0
  %357 = vmatpush.msra.mxu0 0.0
  %358 = vmatpush.msra.mxu0 0.0
  %359 = vmatpush.msra.mxu0 0.0
  %360 = vmatpush.msra.mxu0 0.0
  %361 = vmatpush.msra.mxu0 0.0
  %362 = vmatpush.msra.mxu0 0.0
  %363 = vmatpush.msra.mxu0 0.0
  %364 = vmatpush.msra.mxu0 0.0
  %365 = vmatpush.msra.mxu0 %v344
  %366 = vmatpush.msra.mxu0 %v343
  %367 = vmatpush.msra.mxu0 %v342
  %368 = vmatpush.msra.mxu0 %v341
  %369 = vmatmul.f32.gmra.mxu0 %v348
  %v370 = vpop.f32.mrf.mxu0
  %v371 = vadd.f32 %v346, %v370
  %372 = vmatmul.f32.gmra.mxu0 %v351
  %v373 = vpop.f32.mrf.mxu0
  %v374 = vadd.f32 %v346, %v373
  %375 = vdwg.mxu0
  %v376 = vmax.f32 %v371, 0.0
  %v377 = vmax.f32 %v374, 0.0
  %v378 = vld [vmem:[%s1 + $0x60] sm:$0xff]
  %v379 = vld [vmem:[%s1 + $0x68] sm:$0xff]
  %v380 = vld [vmem:[%s1 + $0x70] sm:$0xff]
  %v381 = vld [vmem:[%s1 + $0x78] sm:$0xff]
  %384 = vrot.lane.b32.xlu0 %v301, 96
  %v385 = vpop.permute.xlu0 %384
  %386 = vrot.lane.b32.xlu0 %v304, 96
  %v387 = vpop.permute.xlu0 %386
  %v391 = vsel %vm207, %v376, 0
  %v394 = vsel %vm207, %v377, 0
  %396 = vmatpush.msra.mxu0 0.0
  %397 = vmatpush.msra.mxu0 0.0
  %398 = vmatpush.msra.mxu0 0.0
  %399 = vmatpush.msra.mxu0 0.0
  %400 = vmatpush.msra.mxu0 0.0
  %401 = vmatpush.msra.mxu0 0.0
  %402 = vmatpush.msra.mxu0 0.0
  %403 = vmatpush.msra.mxu0 0.0
  %404 = vmatpush.msra.mxu0 0.0
  %405 = vmatpush.msra.mxu0 0.0
  %406 = vmatpush.msra.mxu0 0.0
  %407 = vmatpush.msra.mxu0 0.0
  %408 = vmatpush.msra.mxu0 %v381
  %409 = vmatpush.msra.mxu0 %v380
  %410 = vmatpush.msra.mxu0 %v379
  %411 = vmatpush.msra.mxu0 %v378
  %412 = vmatmul.f32.gmra.mxu0 %v391
  %v413 = vpop.f32.mrf.mxu0
  %v414 = vadd.f32 %v385, %v413
  %415 = vmatmul.f32.gmra.mxu0 %v394
  %v416 = vpop.f32.mrf.mxu0
  %v417 = vadd.f32 %v387, %v416
  %418 = vdwg.mxu0
  %vm419 = vcmp.gt.f32.partialorder %v414, 0.0
  %vm420 = vcmp.gt.f32.partialorder %v417, 0.0
  %v421 = vmul.f32 %v414, 0.2
  %v422 = vmul.f32 %v417, 0.2
  %v423 = vsel %vm419, %v414, %v421
  %v424 = vsel %vm420, %v417, %v422
  %vm425 = vcmask 7168
  %v426 = vsel %vm425, %v423, -inf
  %v427 = vsel %vm425, %v424, -inf
  %v428 = vmax.f32 %v426, %v427
  %v429 = vrot.slane %v428, 4
  %v430 = vmax.f32 %v428, %v429
  %v431 = vrot.slane %v430, 2
  %v432 = vmax.f32 %v430, %v431
  %v433 = vrot.slane %v432, 1
  %v434 = vmax.f32 %v432, %v433
  %v435 = vsub.f32 %v423, %v434
  %v436 = vsub.f32 %v424, %v434
  %v437 = vmul.f32 %v435, 1.442695
  %v438 = vpow.pop %v437
  %v439 = vmul.f32 %v436, 1.442695
  %v440 = vpow.pop %v439
  %v442 = vsel %vm57, %v251, 0
  %444 = vmatpush.msra.mxu0 0.0
  %445 = vmatpush.msra.mxu0 0.0
  %446 = vmatpush.msra.mxu0 0.0
  %447 = vmatpush.msra.mxu0 0.0
  %448 = vmatpush.msra.mxu0 0.0
  %449 = vmatpush.msra.mxu0 0.0
  %450 = vmatpush.msra.mxu0 0.0
  %451 = vmatpush.msra.mxu0 0.0
  %452 = vmatpush.msra.mxu0 0.0
  %453 = vmatpush.msra.mxu0 0.0
  %454 = vmatpush.msra.mxu0 0.0
  %455 = vmatpush.msra.mxu0 0.0
  %456 = vmatpush.msra.mxu0 0.0
  %457 = vmatpush.msra.mxu0 0.0
  %458 = vmatpush.msra.mxu0 %v440
  %459 = vmatpush.msra.mxu0 %v438
  %460 = vmatmul.f32.gmra.mxu0 %v442
  %v461 = vpop.f32.mrf.mxu0
  %v462 = vadd.f32 0.0, %v461
  %463 = vdwg.mxu0
  %v465 = vsel %vm279, %v462, 0
  %467 = vmatpush.msra.mxu0 0.0
  %468 = vmatpush.msra.mxu0 0.0
  %469 = vmatpush.msra.mxu0 0.0
  %470 = vmatpush.msra.mxu0 0.0
  %471 = vmatpush.msra.mxu0 0.0
  %472 = vmatpush.msra.mxu0 0.0
  %473 = vmatpush.msra.mxu0 0.0
  %474 = vmatpush.msra.mxu0 0.0
  %475 = vmatpush.msra.mxu0 0.0
  %476 = vmatpush.msra.mxu0 0.0
  %477 = vmatpush.msra.mxu0 0.0
  %478 = vmatpush.msra.mxu0 0.0
  %479 = vmatpush.msra.mxu0 0.0
  %480 = vmatpush.msra.mxu0 0.0
  %481 = vmatpush.msra.mxu0 0.0
  %482 = vmatpush.msra.mxu0 %v465
  %483 = vmatmul.f32.gmra.mxu0 %v274
  %v484 = vpop.f32.mrf.mxu0
  %v485 = vadd.f32 0.0, %v484
  %486 = vmatmul.f32.gmra.mxu0 %v277
  %v487 = vpop.f32.mrf.mxu0
  %v488 = vadd.f32 0.0, %v487
  %489 = vdwg.mxu0
  %v490 = vmul.f32 %v485, 8.0
  %v491 = vmul.f32 %v488, 8.0
  %v492 = vrcp.pop %v490
  %v493 = vmul.f32 %v490, %v492
  %v494 = vsub.f32 1.0, %v493
  %v495 = vmul.f32 %v492, %v494
  %v496 = vadd.f32 %v492, %v495
  %vm497 = vweird.f32 %v490
  %vm498 = vweird.f32 %v492
  %vm499 = vmor %vm497, %vm498
  %v500 = vsel %vm499, %v492, %v496
  %v501 = vand.u32 2147483647, %v490
  %vm502 = vcmp.eq.f32.partialorder %v501, 8.507059e+37
  %v503 = vand.u32 %v490, 2147483648
  %v504 = vor.u32 1.1754944e-38, %v503
  %v505 = vsel %vm502, %v504, %v500
  %v506 = vmul.f32 %v438, %v505
  %v507 = vrcp.pop %v491
  %v508 = vmul.f32 %v491, %v507
  %v509 = vsub.f32 1.0, %v508
  %v510 = vmul.f32 %v507, %v509
  %v511 = vadd.f32 %v507, %v510
  %vm512 = vweird.f32 %v491
  %vm513 = vweird.f32 %v507
  %vm514 = vmor %vm512, %vm513
  %v515 = vsel %vm514, %v507, %v511
  %v516 = vand.u32 2147483647, %v491
  %vm517 = vcmp.eq.f32.partialorder %v516, 8.507059e+37
  %v518 = vand.u32 %v491, 2147483648
  %v519 = vor.u32 1.1754944e-38, %v518
  %v520 = vsel %vm517, %v519, %v515
  %v521 = vmul.f32 %v440, %v520
  %523 = vset.pattern.permute.xlu0 0
  %524 = vperm.xlu0 %523, %v506
  %v525 = vpop.permute.xlu0 %524
  %528 = vset.pattern.permute.xlu0 0
  %529 = vperm.xlu0 %528, %v521
  %v530 = vpop.permute.xlu0 %529
  %v532 = vmul.f32 %v525, %v376
  %v533 = vmul.f32 %v530, %v377
  %534 = vmatpush.msra.mxu0 0.0
  %535 = vmatpush.msra.mxu0 0.0
  %536 = vmatpush.msra.mxu0 0.0
  %537 = vmatpush.msra.mxu0 0.0
  %538 = vmatpush.msra.mxu0 0.0
  %539 = vmatpush.msra.mxu0 0.0
  %540 = vmatpush.msra.mxu0 0.0
  %541 = vmatpush.msra.mxu0 0.0
  %542 = vmatpush.msra.mxu0 0.0
  %543 = vmatpush.msra.mxu0 0.0
  %544 = vmatpush.msra.mxu0 0.0
  %545 = vmatpush.msra.mxu0 0.0
  %546 = vmatpush.msra.mxu0 0.0
  %547 = vmatpush.msra.mxu0 0.0
  %548 = vmatpush.msra.mxu0 %v533
  %549 = vmatpush.msra.mxu0 %v532
  %550 = vmatmul.f32.gmra.mxu0 %v442
  %v551 = vpop.f32.mrf.mxu0
  %v552 = vadd.f32 0.0, %v551
  %553 = vdwg.mxu0
  %v554 = vld [vmem:[%s1 + $0xa0] sm:$0xff]
  %v555 = vld [vmem:[%s1 + $0xa8] sm:$0xff]
  %v556 = vld [vmem:[%s1 + $0xb0] sm:$0xff]
  %v557 = vld [vmem:[%s1 + $0xb8] sm:$0xff]
  %v558 = vld [vmem:[%s2 + $0x2] sm:$0x1]
  %v559 = vperm.slane %v558, 0
  %v561 = vsel %vm207, %v205, 0
  %563 = vmatpush.msra.mxu0 0.0
  %564 = vmatpush.msra.mxu0 0.0
  %565 = vmatpush.msra.mxu0 0.0
  %566 = vmatpush.msra.mxu0 0.0
  %567 = vmatpush.msra.mxu0 0.0
  %568 = vmatpush.msra.mxu0 0.0
  %569 = vmatpush.msra.mxu0 0.0
  %570 = vmatpush.msra.mxu0 0.0
  %571 = vmatpush.msra.mxu0 0.0
  %572 = vmatpush.msra.mxu0 0.0
  %573 = vmatpush.msra.mxu0 0.0
  %574 = vmatpush.msra.mxu0 0.0
  %575 = vmatpush.msra.mxu0 %v557
  %576 = vmatpush.msra.mxu0 %v556
  %577 = vmatpush.msra.mxu0 %v555
  %578 = vmatpush.msra.mxu0 %v554
  %579 = vmatmul.f32.gmra.mxu0 %v561
  %v580 = vpop.f32.mrf.mxu0
  %v581 = vadd.f32 %v559, %v580
  %582 = vmatmul.f32.gmra.mxu0 %v219
  %v583 = vpop.f32.mrf.mxu0
  %v584 = vadd.f32 %v559, %v583
  %585 = vdwg.mxu0
  %v586 = vld [vmem:[%s1 + $0x80] sm:$0xff]
  %v587 = vld [vmem:[%s1 + $0x88] sm:$0xff]
  %v588 = vld [vmem:[%s1 + $0x90] sm:$0xff]
  %v589 = vld [vmem:[%s1 + $0x98] sm:$0xff]
  %v591 = vsel %vm207, %v552, 0
  %593 = vmatpush.msra.mxu0 0.0
  %594 = vmatpush.msra.mxu0 0.0
  %595 = vmatpush.msra.mxu0 0.0
  %596 = vmatpush.msra.mxu0 0.0
  %597 = vmatpush.msra.mxu0 0.0
  %598 = vmatpush.msra.mxu0 0.0
  %599 = vmatpush.msra.mxu0 0.0
  %600 = vmatpush.msra.mxu0 0.0
  %601 = vmatpush.msra.mxu0 0.0
  %602 = vmatpush.msra.mxu0 0.0
  %603 = vmatpush.msra.mxu0 0.0
  %604 = vmatpush.msra.mxu0 0.0
  %605 = vmatpush.msra.mxu0 %v589
  %606 = vmatpush.msra.mxu0 %v588
  %607 = vmatpush.msra.mxu0 %v587
  %608 = vmatpush.msra.mxu0 %v586
  %609 = vmatmul.f32.gmra.mxu0 %v591
  %v610 = vpop.f32.mrf.mxu0
  %v611 = vadd.f32 0.0, %v610
  %612 = vdwg.mxu0
  %v614 = vsel %vm272, %v270, 0
  %v617 = vsel %vm272, %v271, 0
  %v620 = vsel %vm279, %v611, 0
  %622 = vmatpush.msra.mxu0 0.0
  %623 = vmatpush.msra.mxu0 0.0
  %624 = vmatpush.msra.mxu0 0.0
  %625 = vmatpush.msra.mxu0 0.0
  %626 = vmatpush.msra.mxu0 0.0
  %627 = vmatpush.msra.mxu0 0.0
  %628 = vmatpush.msra.mxu0 0.0
  %629 = vmatpush.msra.mxu0 0.0
  %630 = vmatpush.msra.mxu0 0.0
  %631 = vmatpush.msra.mxu0 0.0
  %632 = vmatpush.msra.mxu0 0.0
  %633 = vmatpush.msra.mxu0 0.0
  %634 = vmatpush.msra.mxu0 0.0
  %635 = vmatpush.msra.mxu0 0.0
  %636 = vmatpush.msra.mxu0 0.0
  %637 = vmatpush.msra.mxu0 %v620
  %638 = vmatmul.f32.gmra.mxu0 %v614
  %v639 = vpop.f32.mrf.mxu0
  %v640 = vadd.f32 0.0, %v639
  %641 = vmatmul.f32.gmra.mxu0 %v617
  %v642 = vpop.f32.mrf.mxu0
  %v643 = vadd.f32 0.0, %v642
  %644 = vdwg.mxu0
  %v645 = vadd.f32 %v581, %v640
  %v646 = vadd.f32 %v584, %v643
  %v647 = vmax.f32 %v645, 0.0
  %v648 = vmax.f32 %v646, 0.0
  %v649 = vld [vmem:[%s1 + $0xc0] sm:$0xff]
  %v650 = vld [vmem:[%s1 + $0xc8] sm:$0xff]
  %v651 = vld [vmem:[%s1 + $0xd0] sm:$0xff]
  %v652 = vld [vmem:[%s1 + $0xd8] sm:$0xff]
  %v653 = vld [vmem:[%s2 + $0x3] sm:$0x1]
  %v654 = vperm.slane %v653, 0
  %v656 = vsel %vm207, %v647, 0
  %v659 = vsel %vm207, %v648, 0
  %661 = vmatpush.msra.mxu0 0.0
  %662 = vmatpush.msra.mxu0 0.0
  %663 = vmatpush.msra.mxu0 0.0
  %664 = vmatpush.msra.mxu0 0.0
  %665 = vmatpush.msra.mxu0 0.0
  %666 = vmatpush.msra.mxu0 0.0
  %667 = vmatpush.msra.mxu0 0.0
  %668 = vmatpush.msra.mxu0 0.0
  %669 = vmatpush.msra.mxu0 0.0
  %670 = vmatpush.msra.mxu0 0.0
  %671 = vmatpush.msra.mxu0 0.0
  %672 = vmatpush.msra.mxu0 0.0
  %673 = vmatpush.msra.mxu0 %v652
  %674 = vmatpush.msra.mxu0 %v651
  %675 = vmatpush.msra.mxu0 %v650
  %676 = vmatpush.msra.mxu0 %v649
  %677 = vmatmul.f32.gmra.mxu0 %v656
  %v678 = vpop.f32.mrf.mxu0
  %v679 = vadd.f32 %v654, %v678
  %680 = vmatmul.f32.gmra.mxu0 %v659
  %v681 = vpop.f32.mrf.mxu0
  %v682 = vadd.f32 %v654, %v681
  %683 = vdwg.mxu0
  %v684 = vmax.f32 %v679, 0.0
  %v685 = vmax.f32 %v682, 0.0
  %v686 = vld [vmem:[%s1 + $0x100] sm:$0xff]
  %v687 = vld [vmem:[%s1 + $0x108] sm:$0xff]
  %v688 = vld [vmem:[%s1 + $0x110] sm:$0xff]
  %v689 = vld [vmem:[%s1 + $0x118] sm:$0xff]
  %v690 = vld [vmem:[%s2 + $0xb] sm:$0x1]
  %v691 = vperm.slane %v690, 0
  %v693 = vsel %vm207, %v685, 0
  %695 = vmatpush.msra.mxu0 0.0
  %696 = vmatpush.msra.mxu0 0.0
  %697 = vmatpush.msra.mxu0 0.0
  %698 = vmatpush.msra.mxu0 0.0
  %699 = vmatpush.msra.mxu0 0.0
  %700 = vmatpush.msra.mxu0 0.0
  %701 = vmatpush.msra.mxu0 0.0
  %702 = vmatpush.msra.mxu0 0.0
  %703 = vmatpush.msra.mxu0 0.0
  %704 = vmatpush.msra.mxu0 0.0
  %705 = vmatpush.msra.mxu0 0.0
  %706 = vmatpush.msra.mxu0 0.0
  %707 = vmatpush.msra.mxu0 %v689
  %708 = vmatpush.msra.mxu0 %v688
  %709 = vmatpush.msra.mxu0 %v687
  %710 = vmatpush.msra.mxu0 %v686
  %711 = vmatmul.f32.gmra.mxu0 %v693
  %v712 = vpop.f32.mrf.mxu0
  %v713 = vadd.f32 %v691, %v712
  %714 = vdwg.mxu0
  %v715 = vld [vmem:[%s1 + $0x120] sm:$0xff]
  %v716 = vld [vmem:[%s1 + $0x128] sm:$0xff]
  %v717 = vld [vmem:[%s1 + $0x130] sm:$0xff]
  %v718 = vld [vmem:[%s1 + $0x138] sm:$0xff]
  %v719 = vmul.f32 %v713, 0.5
  %v720 = vtanh.pop %v719
  %v721 = vmul.f32 %v720, 0.5
  %v722 = vadd.f32 %v721, 0.5
  %v723 = vtanh.pop %v713
  %725 = vrot.lane.b32.xlu0 %v723, 80
  %v726 = vpop.permute.xlu0 %725
  %v728 = vmul.f32 %v722, %v726
  %v729 = vtanh.pop %v728
  %731 = vrot.lane.b32.xlu0 %v729, 32
  %v732 = vpop.permute.xlu0 %731
  %v734 = vmul.f32 %v722, %v732
  %vm735 = vcmp.eq.s32.totalorder %v244, 0
  %v736 = vsel %vm735, 1, 0
  %v737 = vcvt.s32.f32 %v736
  %v738 = vperm.slane %v734, 0
  %v739 = vmul.f32 %v737, %v738
  %741 = vrot.lane.b32.xlu0 %v734, 96
  %v742 = vpop.permute.xlu0 %741
  %v743 = vsel %vm57, %v742, 0
  %745 = vmatpush.msra.mxu0 0.0
  %746 = vmatpush.msra.mxu0 0.0
  %747 = vmatpush.msra.mxu0 0.0
  %748 = vmatpush.msra.mxu0 0.0
  %749 = vmatpush.msra.mxu0 0.0
  %750 = vmatpush.msra.mxu0 0.0
  %751 = vmatpush.msra.mxu0 0.0
  %752 = vmatpush.msra.mxu0 0.0
  %753 = vmatpush.msra.mxu0 0.0
  %754 = vmatpush.msra.mxu0 0.0
  %755 = vmatpush.msra.mxu0 0.0
  %756 = vmatpush.msra.mxu0 0.0
  %757 = vmatpush.msra.mxu0 0.0
  %758 = vmatpush.msra.mxu0 0.0
  %759 = vmatpush.msra.mxu0 %v716
  %760 = vmatpush.msra.mxu0 %v715
  %761 = vmatmul.f32.gmra.mxu0 %v743
  %v762 = vpop.f32.mrf.mxu0
  %v763 = vadd.f32 0.0, %v762
  %764 = vdwg.mxu0
  %v766 = vrot.slane %v763, 7
  %v768 = vadd.f32 %v713, %v766
  %v769 = vmul.f32 %v768, 0.5
  %v770 = vtanh.pop %v769
  %v771 = vmul.f32 %v770, 0.5
  %v772 = vadd.f32 %v771, 0.5
  %v773 = vtanh.pop %v768
  %v775 = vrot.slane %v728, 7
  %776 = vrot.lane.b32.xlu0 %v775, 16
  %v777 = vpop.permute.xlu0 %776
  %v779 = vmul.f32 %v772, %v777
  %781 = vrot.lane.b32.xlu0 %v773, 80
  %v782 = vpop.permute.xlu0 %781
  %v784 = vmul.f32 %v772, %v782
  %786 = vrot.lane.b32.xlu0 %v784, 16
  %v787 = vpop.permute.xlu0 %786
  %v789 = vadd.f32 %v779, %v787
  %v790 = vtanh.pop %v789
  %792 = vrot.lane.b32.xlu0 %v790, 16
  %v793 = vpop.permute.xlu0 %792
  %v795 = vmul.f32 %v772, %v793
  %vm796 = vcmp.eq.s32.totalorder %v244, 1
  %v797 = vsel %vm796, 1, 0
  %v798 = vcvt.s32.f32 %v797
  %v799 = vperm.slane %v795, 1
  %v800 = vmul.f32 %v798, %v799
  %v801 = vadd.f32 %v739, %v800
  %v802 = vperm.slane %v734, 1
  %v803 = vmul.f32 %v798, %v802
  %v804 = vrot.slane %v734, 1
  %805 = vrot.lane.b32.xlu0 %v804, 32
  %v806 = vpop.permute.xlu0 %805
  %v807 = vsel %vm57, %v806, 0
  %809 = vmatpush.msra.mxu0 0.0
  %810 = vmatpush.msra.mxu0 0.0
  %811 = vmatpush.msra.mxu0 0.0
  %812 = vmatpush.msra.mxu0 0.0
  %813 = vmatpush.msra.mxu0 0.0
  %814 = vmatpush.msra.mxu0 0.0
  %815 = vmatpush.msra.mxu0 0.0
  %816 = vmatpush.msra.mxu0 0.0
  %817 = vmatpush.msra.mxu0 0.0
  %818 = vmatpush.msra.mxu0 0.0
  %819 = vmatpush.msra.mxu0 0.0
  %820 = vmatpush.msra.mxu0 0.0
  %821 = vmatpush.msra.mxu0 0.0
  %822 = vmatpush.msra.mxu0 0.0
  %823 = vmatpush.msra.mxu0 %v718
  %824 = vmatpush.msra.mxu0 %v717
  %825 = vmatmul.f32.gmra.mxu0 %v807
  %v826 = vpop.f32.mrf.mxu0
  %v827 = vadd.f32 0.0, %v826
  %828 = vdwg.mxu0
  %830 = vrot.lane.b32.xlu0 %v827, 64
  %v831 = vpop.permute.xlu0 %830
  %v833 = vadd.f32 %v713, %v831
  %v834 = vmul.f32 %v833, 0.5
  %v835 = vtanh.pop %v834
  %v836 = vmul.f32 %v835, 0.5
  %v837 = vadd.f32 %v836, 0.5
  %v838 = vtanh.pop %v833
  %v839 = vrot.slane %v728, 1
  %840 = vrot.lane.b32.xlu0 %v839, 16
  %v841 = vpop.permute.xlu0 %840
  %v843 = vmul.f32 %v837, %v841
  %845 = vrot.lane.b32.xlu0 %v838, 80
  %v846 = vpop.permute.xlu0 %845
  %v848 = vmul.f32 %v837, %v846
  %850 = vrot.lane.b32.xlu0 %v848, 16
  %v851 = vpop.permute.xlu0 %850
  %v853 = vadd.f32 %v843, %v851
  %v854 = vtanh.pop %v853
  %856 = vrot.lane.b32.xlu0 %v854, 16
  %v857 = vpop.permute.xlu0 %856
  %v859 = vmul.f32 %v837, %v857
  %v860 = vperm.slane %v859, 0
  %v861 = vmul.f32 %v737, %v860
  %v862 = vadd.f32 %v803, %v861
  %v863 = vld [vmem:[%s1 + $0x140] sm:$0xff]
  %v864 = vld [vmem:[%s1 + $0x148] sm:$0xff]
  %v865 = vld [vmem:[%s1 + $0x150] sm:$0xff]
  %v866 = vld [vmem:[%s1 + $0x158] sm:$0xff]
  %v867 = vld [vmem:[%s2 + $0x4] sm:$0x1]
  %v868 = vperm.slane %v867, 0
  %v870 = vsel %vm207, %v684, 0
  %872 = vmatpush.msra.mxu0 0.0
  %873 = vmatpush.msra.mxu0 0.0
  %874 = vmatpush.msra.mxu0 0.0
  %875 = vmatpush.msra.mxu0 0.0
  %876 = vmatpush.msra.mxu0 0.0
  %877 = vmatpush.msra.mxu0 0.0
  %878 = vmatpush.msra.mxu0 0.0
  %879 = vmatpush.msra.mxu0 0.0
  %880 = vmatpush.msra.mxu0 0.0
  %881 = vmatpush.msra.mxu0 0.0
  %882 = vmatpush.msra.mxu0 0.0
  %883 = vmatpush.msra.mxu0 0.0
  %884 = vmatpush.msra.mxu0 %v866
  %885 = vmatpush.msra.mxu0 %v865
  %886 = vmatpush.msra.mxu0 %v864
  %887 = vmatpush.msra.mxu0 %v863
  %888 = vmatmul.f32.gmra.mxu0 %v870
  %v889 = vpop.f32.mrf.mxu0
  %v890 = vadd.f32 %v868, %v889
  %891 = vdwg.mxu0
  %v892 = vmul.f32 %v890, 0.5
  %v893 = vtanh.pop %v892
  %v894 = vmul.f32 %v893, 0.5
  %v895 = vadd.f32 %v894, 0.5
  %896 = vst [vmem:[%s3] sm:$0xff] %v895
  %898 = vrot.lane.b32.xlu0 %v862, 32
  %v899 = vpop.permute.xlu0 %898
  %v900 = vsel %vm57, %v899, 0
  %902 = vmatpush.msra.mxu0 0.0
  %903 = vmatpush.msra.mxu0 0.0
  %904 = vmatpush.msra.mxu0 0.0
  %905 = vmatpush.msra.mxu0 0.0
  %906 = vmatpush.msra.mxu0 0.0
  %907 = vmatpush.msra.mxu0 0.0
  %908 = vmatpush.msra.mxu0 0.0
  %909 = vmatpush.msra.mxu0 0.0
  %910 = vmatpush.msra.mxu0 0.0
  %911 = vmatpush.msra.mxu0 0.0
  %912 = vmatpush.msra.mxu0 0.0
  %913 = vmatpush.msra.mxu0 0.0
  %914 = vmatpush.msra.mxu0 0.0
  %915 = vmatpush.msra.mxu0 0.0
  %916 = vmatpush.msra.mxu0 %v866
  %917 = vmatpush.msra.mxu0 %v865
  %918 = vmatmul.f32.gmra.mxu0 %v900
  %v919 = vpop.f32.mrf.mxu0
  %v920 = vadd.f32 0.0, %v919
  %921 = vdwg.mxu0
  %923 = vrot.lane.b32.xlu0 %v801, 96
  %v924 = vpop.permute.xlu0 %923
  %v925 = vsel %vm57, %v924, 0
  %927 = vmatpush.msra.mxu0 0.0
  %928 = vmatpush.msra.mxu0 0.0
  %929 = vmatpush.msra.mxu0 0.0
  %930 = vmatpush.msra.mxu0 0.0
  %931 = vmatpush.msra.mxu0 0.0
  %932 = vmatpush.msra.mxu0 0.0
  %933 = vmatpush.msra.mxu0 0.0
  %934 = vmatpush.msra.mxu0 0.0
  %935 = vmatpush.msra.mxu0 0.0
  %936 = vmatpush.msra.mxu0 0.0
  %937 = vmatpush.msra.mxu0 0.0
  %938 = vmatpush.msra.mxu0 0.0
  %939 = vmatpush.msra.mxu0 0.0
  %940 = vmatpush.msra.mxu0 0.0
  %941 = vmatpush.msra.mxu0 %v864
  %942 = vmatpush.msra.mxu0 %v863
  %943 = vmatmul.f32.gmra.mxu0 %v925
  %v944 = vpop.f32.mrf.mxu0
  %v945 = vadd.f32 %v920, %v944
  %946 = vdwg.mxu0
  %v947 = vadd.f32 %v945, %v868
  %v948 = vmul.f32 %v947, 0.5
  %v949 = vtanh.pop %v948
  %v950 = vmul.f32 %v949, 0.5
  %v951 = vadd.f32 %v950, 0.5
  %952 = vst [vmem:[%s3 + $0x8] sm:$0x3] %v951
  // Predicated region
  $region14: #{_lambda_.1} parent=0 // pred_check
    _
  $region15: #{_lambda_.1} parent=0 // pred_check_branch
    %954 = sbr.rel (0) target = $region17
  $region16: #{_lambda_.1} parent=0 // pred_region
    _
  $region17: #{_lambda_.1} parent=0 // pred_fallthru
    _
  // Predicated region
  $region18: #{_lambda_.1} parent=0 // pred_check
    _
  $region19: #{_lambda_.1} parent=0 // pred_check_branch
    %956 = sbr.rel (0) target = $region21
  $region20: #{_lambda_.1} parent=0 // pred_region
    _
  $region21: #{_lambda_.1} parent=0 // pred_fallthru
    _

</llo_original>
